<compile_context>
chip_gen: v7x
topology: tpu7x:2x2x1
jax: 0.10.0
libtpu: 0.0.40
codegen_flags: <defaults>
</compile_context>

<pallas_src>
import itertools

import jax
import jax.numpy as jnp
import numpy as np
from jax.experimental import pallas as pl
from jax.experimental.pallas import tpu as pltpu

NBLADES = 8                    # 2**3 blade components of Cl(3,0,0)
GRADE_SIZES = (1, 3, 3, 1)     # subspace sizes (scalar, vector, bivector, pseudoscalar)
EPS_NORM = 1e-6                # MVLayerNorm eps
EPS_SQRT = 1e-16               # smooth-abs-sqrt eps
LANE = 128                     # TPU lane width


def _build_cayley():
    """Cayley table for Cl(3,0,0), blades ordered [1,e1,e2,e3,e12,e13,e23,e123]."""
    blades = [()]
    for g in (1, 2, 3):
        blades += [tuple(c) for c in itertools.combinations((1, 2, 3), g)]
    idx = {b: i for i, b in enumerate(blades)}
    cayley = np.zeros((NBLADES, NBLADES, NBLADES), dtype=np.float32)
    for i, a in enumerate(blades):
        for j, b in enumerate(blades):
            lst = list(a) + list(b)
            sign = 1.0
            changed = True
            while changed:                       # bubble sort, count swaps
                changed = False
                for t in range(len(lst) - 1):
                    if lst[t] > lst[t + 1]:
                        lst[t], lst[t + 1] = lst[t + 1], lst[t]
                        sign = -sign
                        changed = True
            res, t = [], 0                       # contract e_i e_i = +1 (Euclidean)
            while t < len(lst):
                if t + 1 < len(lst) and lst[t] == lst[t + 1]:
                    t += 2
                else:
                    res.append(lst[t])
                    t += 1
            cayley[i, j, idx[tuple(res)]] = sign
    return cayley


CAYLEY = _build_cayley()


def _round_up(x, m):
    return (x + m - 1) // m * m


# ----------------------------------------------------------------------------- kernel

def _gp_layer_kernel(x_ref, wl_ref, wr_ref, wog_ref, wox_ref, sel_ref, a_ref, o_ref):
    f32 = jnp.float32
    # In-kernel cast to the matmul operand dtype (x streams from HBM as f32, so there is
    # no extra wrapper-side cast pass over HBM).
    x = x_ref[...].astype(wl_ref.dtype)                        # (TB, cin*8 + 8)

    # All 8 left/right blade projections in two wide MXU matmuls (N = 8 * chid*8).
    # The Cayley table and all biases are pre-folded; the constant-1 column block of x
    # carries the bias rows, so there are no broadcast-bias adds here.
    l_all = jnp.dot(x, wl_ref[...], preferred_element_type=f32)   # (TB, 8*chid8) f32
    r_all = jnp.dot(x, wr_ref[...], preferred_element_type=f32)
    prod = l_all * r_all                                          # VPU, f32

    # Geometric product = blade-sum over the 8 column blocks: 7 VPU adds over
    # 128-lane-aligned static slices (pure vreg selects, no relayout, no extra matmul).
    chid8 = prod.shape[1] // NBLADES
    gp = prod[:, :chid8]
    for i in range(1, NBLADES):
        gp = gp + prod[:, i * chid8:(i + 1) * chid8]

    # Output MVLinear on concat([gp, vec1]) as two matmuls; b_out is folded into wox via
    # the same ones-column.  wog is kept f32 so the f32 gp accumulator is never downcast.
    out = (jnp.dot(gp, wog_ref[...], preferred_element_type=f32)
           + jnp.dot(x, wox_ref[...], preferred_element_type=f32))   # (TB, cout8p) f32

    # MVLayerNorm, all f32: per-channel quadratic form via a 0/1 selector matmul
    # (avoids a stride-8 lane reduction), smooth sqrt as nested EUP sqrts, and an
    # approximate EUP reciprocal instead of a divide.
    q = jnp.dot(out * out, sel_ref[...], preferred_element_type=f32)  # (TB, cout)
    norm = jnp.sqrt(jnp.sqrt(q * q + EPS_SQRT))
    nm = jnp.mean(norm, axis=1, keepdims=True) + EPS_NORM             # (TB, 1)
    inv_nm = pl.reciprocal(nm, approx=True)
    o_ref[...] = (out * a_ref[...] * inv_nm).astype(o_ref.dtype)


# ------------------------------------------------------------------- weight packing

def pack_gp_layer_params(params, *, matmul_dtype=None):
    """Fold per-blade MVLinear weights, the Cayley table and all biases into dense,
    blade-minor, lane-dense matrices consumed by the kernel (done once, host-side)."""
    wl8, bl = params["w_left"], params["b_left"]       # (8, cin, chid), (chid,)
    wr8, br = params["w_right"], params["b_right"]     # (8, cin, chid), (chid,)
    wo8, bo = params["w_out"], params["b_out"]         # (8, chid+cin, cout), (cout,)
    a = params["ln_a"]                                 # (cout,)
    cayley = jnp.asarray(CAYLEY)
    eye8 = jnp.eye(NBLADES, dtype=jnp.float32)

    cin, chid = wl8.shape[1], wl8.shape[2]
    cout = wo8.shape[2]
    cin8, chid8, cout8 = cin * NBLADES, chid * NBLADES, cout * NBLADES
    k_aug = cin8 + NBLADES                      # extra 8 columns: bias carrier block
    n_wide = NBLADES * chid8                    # fused N of the left/right projections
    cout8p = max(_round_up(cout8, LANE), LANE)  # lane-dense (>=128) output width

    # Per-left-blade L_i weights: WL_i[ci*8+k, co*8+m] = wl8[i, ci, co] * delta(k, i)
    wl_stack = jnp.einsum("nio,nk->niko", wl8, eye8)                    # (8, cin, 8, chid)
    wl_stack = jnp.broadcast_to(wl_stack[..., None],
                                (NBLADES, cin, NBLADES, chid, NBLADES))
    wl_stack = wl_stack.reshape(NBLADES, cin8, chid8)
    # R_i weights (Cayley folded in): WR_i[ci*8+j, co*8+m] = Cayley[i, j, m]*wr8[j, ci, co]
    wr_stack = jnp.einsum("jio,njm->nijom", wr8, cayley).reshape(NBLADES, cin8, chid8)

    # Wide fused matrices: column block i of WL_all / WR_all is WL_i / WR_i.
    wl_wide = jnp.transpose(wl_stack, (1, 0, 2)).reshape(cin8, n_wide)
    wr_wide = jnp.transpose(wr_stack, (1, 0, 2)).reshape(cin8, n_wide)

    # Bias rows (folded into row cin8, multiplied by the ones-column of x):
    #  * left bias sits on blade 0 of `left`, so it reaches L_i only for i==0 (all m);
    #  * right bias enters R_i only at m == i because Cayley[i, 0, m] = delta(i, m).
    bl_row = (jnp.zeros((NBLADES, chid, NBLADES), jnp.float32)
              .at[0].set(bl[:, None])).reshape(n_wide)
    br_row = jnp.einsum("o,nm->nom", br, eye8).reshape(n_wide)

    wl_aug = jnp.zeros((k_aug, n_wide), jnp.float32).at[:cin8].set(wl_wide).at[cin8].set(bl_row)
    wr_aug = jnp.zeros((k_aug, n_wide), jnp.float32).at[:cin8].set(wr_wide).at[cin8].set(br_row)

    # Output projection, pre-split into the gp part and the vec1 part, columns padded to
    # the lane-dense output width; b_out folded into the ones-row of the vec1 part.
    wo_gp8, wo_x8 = wo8[:, :chid, :], wo8[:, chid:, :]
    wog = jnp.einsum("mco,mk->cmok", wo_gp8, eye8).reshape(chid8, cout8)
    wog = jnp.pad(wog, ((0, 0), (0, cout8p - cout8)))
    wox = jnp.einsum("mco,mk->cmok", wo_x8, eye8).reshape(cin8, cout8)
    wox = jnp.pad(wox, ((0, 0), (0, cout8p - cout8)))
    bo_row = (jnp.zeros((cout, NBLADES), jnp.float32).at[:, 0].set(bo)).reshape(cout8)
    bo_row = jnp.pad(bo_row, (0, cout8p - cout8))
    wox_aug = jnp.zeros((k_aug, cout8p), jnp.float32).at[:cin8].set(wox).at[cin8].set(bo_row)

    # Blade-sum selector for the layernorm quadratic form (true cout columns; padded
    # output lanes map to zero rows), and the lane-dense layernorm scale.
    sel = jnp.repeat(jnp.eye(cout, dtype=jnp.float32), NBLADES, axis=0)   # (cout8, cout)
    sel = jnp.pad(sel, ((0, cout8p - cout8), (0, 0)))
    a_row = jnp.pad(jnp.repeat(a.reshape(cout), NBLADES),
                    (0, cout8p - cout8)).reshape(1, cout8p)

    if matmul_dtype is not None:
        # bf16 MXU operands are a win on every generation (v5e's MXU is bf16-native);
        # wog is intentionally kept f32 so gp is never downcast before the out projection.
        wl_aug = wl_aug.astype(matmul_dtype)
        wr_aug = wr_aug.astype(matmul_dtype)
        wox_aug = wox_aug.astype(matmul_dtype)

    return dict(wl=wl_aug, wr=wr_aug, wog=wog, wox=wox_aug, sel=sel, a=a_row,
                dims=(cin, chid, cout))


# ------------------------------------------------------------------------- wrapper

def linear_fc_gp_layer(vec1, packed, *, tile_b=1024):
    """vec1: (B, in_dims, 8) float32 -> (B, out_dims, 8)."""
    B, c_in, nb = vec1.shape
    assert nb == NBLADES
    cin, chid, cout = packed["dims"]
    assert c_in == cin
    cin8, chid8, cout8 = cin * NBLADES, chid * NBLADES, cout * NBLADES
    k_aug = cin8 + NBLADES
    n_wide = NBLADES * chid8
    cout8p = packed["a"].shape[1]

    # Free row-major reshape of (B, C, 8) -> (B, C*8), plus the bias-carrier block
    # (column cin8 = 1, rest 0).  x stays f32; the matmul-dtype cast happens in-kernel.
    x = vec1.reshape(B, cin8)
    carrier = jnp.zeros((B, NBLADES), vec1.dtype).at[:, 0].set(1.0)
    x = jnp.concatenate([x, carrier], axis=1)                    # (B, k_aug)

    # Large batch tiles, but keep >= 2 grid steps so the parallel batch axis can shard
    # across v7x's two TensorCores (harmless elsewhere: ~0.35us per extra grid step).
    granule = 8
    tb = min(_round_up(tile_b, granule),
             _round_up(B, granule),
             _round_up(max((B + 1) // 2, granule), granule))
    b_pad = _round_up(B, tb)
    if b_pad != B:   # zero rows are harmless: eps keeps the LN denominator positive
        x = jnp.pad(x, ((0, b_pad - B), (0, 0)))

    # VMEM watermark: double-buffered x/out blocks, (conservatively double-buffered)
    # resident weights, plus f32 temporaries.  Cap at 3/4 of physical VMEM
    # (~48 MiB on v7x's 64 MiB, ~96 MiB on v5e/v6e's 128 MiB).
    mm_bytes = jnp.dtype(packed["wl"].dtype).itemsize
    weight_bytes = ((2 * k_aug * n_wide + k_aug * cout8p) * mm_bytes
                    + (chid8 * cout8p + cout8p * cout + cout8p) * 4)
    act_bytes = tb * (k_aug + cout8p) * 4
    tmp_bytes = tb * (2 * n_wide + chid8 + cout8p + cout) * 4
    est = 2 * act_bytes + 2 * weight_bytes + tmp_bytes
    try:
        phys = int(pltpu.get_tpu_info().vmem_capacity_bytes)
    except Exception:
        phys = 64 * 1024 * 1024                 # conservative (v7x) fallback
    cap = (phys * 3) // 4
    vmem_limit = int(min(max(est + (8 << 20), 32 << 20), cap))
    # TODO(synk): if weight_bytes alone ever exceeds `cap` (very large cin/chid), add a
    # second grid axis tiling chid instead of relying on this clamp.

    const2 = lambda b: (0, 0)

    out = pl.pallas_call(
        _gp_layer_kernel,
        out_shape=jax.ShapeDtypeStruct((b_pad, cout8p), vec1.dtype),
        grid=(b_pad // tb,),
        in_specs=[
            pl.BlockSpec((tb, k_aug), lambda b: (b, 0)),     # x (+ bias carrier), streamed
            # Weights/biases use constant index maps -> fetched once and kept resident
            # in VMEM across the batch grid (no per-step re-DMA).
            pl.BlockSpec((k_aug, n_wide), const2),           # fused WL (biases folded)
            pl.BlockSpec((k_aug, n_wide), const2),           # fused WR (Cayley + bias folded)
            pl.BlockSpec((chid8, cout8p), const2),           # W_out (gp part, f32)
            pl.BlockSpec((k_aug, cout8p), const2),           # W_out (vec1 part, b_out folded)
            pl.BlockSpec((cout8p, cout), const2),            # blade-sum selector
            pl.BlockSpec((1, cout8p), const2),               # layernorm scale a
        ],
        out_specs=pl.BlockSpec((tb, cout8p), lambda b: (b, 0)),
        compiler_params=pltpu.CompilerParams(
            dimension_semantics=("parallel",),   # batch axis shards across v7x's 2 TCs
            vmem_limit_bytes=vmem_limit),
    )(x, packed["wl"], packed["wr"], packed["wog"], packed["wox"],
      packed["sel"], packed["a"])

    return out[:B, :cout8].reshape(B, cout, NBLADES)


# ------------------------------------------------------------------ params & reference

def make_params(key, in_dims, hidden_dims, out_dims):
    """Deterministic synthetic parameters matching the module's __init__ shapes."""
    ks = jax.random.split(key, 6)

    def mvlinear_params(kw, kb, cin, cout):
        # MVLinear(subspaces=True): weight (cout, cin, 4) tied per grade -> 8 blades.
        w4 = jax.random.normal(kw, (cout, cin, 4), jnp.float32) / np.sqrt(cin)
        w8 = np.repeat(np.asarray(w4), GRADE_SIZES, axis=-1)       # (cout, cin, 8)
        wk = jnp.asarray(np.transpose(w8, (2, 1, 0)))              # (8, cin, cout)
        b = jax.random.normal(kb, (cout,), jnp.float32) * 0.1      # bias on scalar blade
        return wk, b

    wl, bl = mvlinear_params(ks[0], ks[1], in_dims, hidden_dims)
    wr, br = mvlinear_params(ks[2], ks[3], in_dims, hidden_dims)
    wo, bo = mvlinear_params(ks[4], ks[5], hidden_dims + in_dims, out_dims)
    a = jnp.ones((out_dims,), jnp.float32)                         # MVLayerNorm scale init
    return dict(w_left=wl, b_left=bl, w_right=wr, b_right=br,
                w_out=wo, b_out=bo, ln_a=a)


def reference(vec1, params):
    """Pure-JAX reference of the PyTorch forward pass."""
    cayley = jnp.asarray(CAYLEY)

    def mvlinear(x, wk, b):
        out = jnp.einsum("bmi,imn->bni", x, wk)                    # per-blade mixing
        return out.at[..., 0].add(b)                               # bias on scalar blade

    right = mvlinear(vec1, params["w_right"], params["b_right"])
    left = mvlinear(vec1, params["w_left"], params["b_left"])
    gp = jnp.einsum("...i,ijk,...j->...k", left, cayley, right)
    cat = jnp.concatenate([gp, vec1], axis=1)
    out = mvlinear(cat, params["w_out"], params["b_out"])
    q = jnp.sum(out * out, axis=-1, keepdims=True)                 # Euclidean quadratic form
    norm = (q * q + EPS_SQRT) ** 0.25
    nm = jnp.mean(norm, axis=1, keepdims=True) + EPS_NORM
    return params["ln_a"][None, :, None] * out / nm


if __name__ == "__main__":
    B, IN_DIMS, HIDDEN_DIMS, OUT_DIMS = 16, 8, 16, 8
    key = jax.random.PRNGKey(0)
    kx, kp = jax.random.split(key)
    vec1 = jax.random.normal(kx, (B, IN_DIMS, NBLADES), jnp.float32)
    params = make_params(kp, IN_DIMS, HIDDEN_DIMS, OUT_DIMS)
    ref = jax.block_until_ready(reference(vec1, params))

    # f32 matmul path, checked against the pure-JAX reference.
    packed_f32 = pack_gp_layer_params(params)
    out = jax.block_until_ready(linear_fc_gp_layer(vec1, packed_f32))
    assert out.shape == (B, OUT_DIMS, NBLADES)
    if not np.allclose(np.asarray(out), np.asarray(ref), rtol=5e-2, atol=5e-2):
        err = float(jnp.max(jnp.abs(out - ref)))
        raise AssertionError(f"kernel vs reference mismatch (f32), max abs err = {err}")

    # bf16 matmul-operand path (fast MXU path on every generation; geometric product,
    # out-projection of gp, and layernorm stay f32).
    packed_bf16 = pack_gp_layer_params(params, matmul_dtype=jnp.bfloat16)
    out_bf16 = jax.block_until_ready(linear_fc_gp_layer(vec1, packed_bf16))
    assert out_bf16.shape == (B, OUT_DIMS, NBLADES)
    assert bool(jnp.all(jnp.isfinite(out_bf16)))
    if not np.allclose(np.asarray(out_bf16, dtype=np.float32), np.asarray(ref),
                       rtol=2e-1, atol=2e-1):
        err = float(jnp.max(jnp.abs(out_bf16 - ref)))
        raise AssertionError(f"kernel vs reference mismatch (bf16), max abs err = {err}")

    print("KERNEL_OK")
</pallas_src>

<mosaic_0001>
module attributes {stable_mosaic.version = 11 : i64} {
  func.func @_gp_layer_kernel(%arg0: i32, %arg1: memref<8x72xf32, #tpu.memory_space<vmem>>, %arg2: memref<72x1024xf32, #tpu.memory_space<vmem>>, %arg3: memref<72x1024xf32, #tpu.memory_space<vmem>>, %arg4: memref<128x128xf32, #tpu.memory_space<vmem>>, %arg5: memref<72x128xf32, #tpu.memory_space<vmem>>, %arg6: memref<128x8xf32, #tpu.memory_space<vmem>>, %arg7: memref<1x128xf32, #tpu.memory_space<vmem>>, %arg8: memref<8x128xf32, #tpu.memory_space<vmem>>) attributes {dimension_semantics = [#tpu.dimension_semantics<parallel>], iteration_bounds = array<i64: 2>, scalar_prefetch = 0 : i64, scratch_operands = 0 : i64, tpu.core_type = #tpu.core_type<tc>, window_params = [{transform_indices = @transform_0, window_bounds = array<i64: 8, 72>}, {pipeline_mode = #tpu.pipeline_mode<synchronous>, transform_indices = @transform_1, window_bounds = array<i64: 72, 1024>}, {pipeline_mode = #tpu.pipeline_mode<synchronous>, transform_indices = @transform_2, window_bounds = array<i64: 72, 1024>}, {pipeline_mode = #tpu.pipeline_mode<synchronous>, transform_indices = @transform_3, window_bounds = array<i64: 128, 128>}, {pipeline_mode = #tpu.pipeline_mode<synchronous>, transform_indices = @transform_4, window_bounds = array<i64: 72, 128>}, {pipeline_mode = #tpu.pipeline_mode<synchronous>, transform_indices = @transform_5, window_bounds = array<i64: 128, 8>}, {pipeline_mode = #tpu.pipeline_mode<synchronous>, transform_indices = @transform_6, window_bounds = array<i64: 1, 128>}, {transform_indices = @transform_7, window_bounds = array<i64: 8, 128>}]} {
    %c0 = arith.constant 0 : index
    %c0_0 = arith.constant 0 : index
    %0 = vector.load %arg1[%c0, %c0_0] : memref<8x72xf32, #tpu.memory_space<vmem>>, vector<8x72xf32>
    %c0_1 = arith.constant 0 : index
    %c0_2 = arith.constant 0 : index
    %1 = vector.load %arg2[%c0_1, %c0_2] : memref<72x1024xf32, #tpu.memory_space<vmem>>, vector<72x1024xf32>
    %cst = arith.constant dense<0.000000e+00> : vector<8x1024xf32>
    %2 = tpu.matmul %0, %1, %cst {dimension_numbers = #tpu.dot_dimension_numbers<[1], [0], [0], [1], [0, 0, 1, 1], [], []>} : vector<8x72xf32>, vector<72x1024xf32>, vector<8x1024xf32> -> vector<8x1024xf32>
    %c0_3 = arith.constant 0 : index
    %c0_4 = arith.constant 0 : index
    %3 = vector.load %arg3[%c0_3, %c0_4] : memref<72x1024xf32, #tpu.memory_space<vmem>>, vector<72x1024xf32>
    %cst_5 = arith.constant dense<0.000000e+00> : vector<8x1024xf32>
    %4 = tpu.matmul %0, %3, %cst_5 {dimension_numbers = #tpu.dot_dimension_numbers<[1], [0], [0], [1], [0, 0, 1, 1], [], []>} : vector<8x72xf32>, vector<72x1024xf32>, vector<8x1024xf32> -> vector<8x1024xf32>
    %5 = arith.mulf %2, %4 : vector<8x1024xf32>
    %6 = vector.extract_strided_slice %5 {offsets = [0, 0], sizes = [8, 128], strides = [1, 1]} : vector<8x1024xf32> to vector<8x128xf32>
    %7 = vector.extract_strided_slice %5 {offsets = [0, 128], sizes = [8, 128], strides = [1, 1]} : vector<8x1024xf32> to vector<8x128xf32>
    %8 = arith.addf %6, %7 : vector<8x128xf32>
    %9 = vector.extract_strided_slice %5 {offsets = [0, 256], sizes = [8, 128], strides = [1, 1]} : vector<8x1024xf32> to vector<8x128xf32>
    %10 = arith.addf %8, %9 : vector<8x128xf32>
    %11 = vector.extract_strided_slice %5 {offsets = [0, 384], sizes = [8, 128], strides = [1, 1]} : vector<8x1024xf32> to vector<8x128xf32>
    %12 = arith.addf %10, %11 : vector<8x128xf32>
    %13 = vector.extract_strided_slice %5 {offsets = [0, 512], sizes = [8, 128], strides = [1, 1]} : vector<8x1024xf32> to vector<8x128xf32>
    %14 = arith.addf %12, %13 : vector<8x128xf32>
    %15 = vector.extract_strided_slice %5 {offsets = [0, 640], sizes = [8, 128], strides = [1, 1]} : vector<8x1024xf32> to vector<8x128xf32>
    %16 = arith.addf %14, %15 : vector<8x128xf32>
    %17 = vector.extract_strided_slice %5 {offsets = [0, 768], sizes = [8, 128], strides = [1, 1]} : vector<8x1024xf32> to vector<8x128xf32>
    %18 = arith.addf %16, %17 : vector<8x128xf32>
    %19 = vector.extract_strided_slice %5 {offsets = [0, 896], sizes = [8, 128], strides = [1, 1]} : vector<8x1024xf32> to vector<8x128xf32>
    %20 = arith.addf %18, %19 : vector<8x128xf32>
    %c0_6 = arith.constant 0 : index
    %c0_7 = arith.constant 0 : index
    %21 = vector.load %arg4[%c0_6, %c0_7] : memref<128x128xf32, #tpu.memory_space<vmem>>, vector<128x128xf32>
    %cst_8 = arith.constant dense<0.000000e+00> : vector<8x128xf32>
    %22 = tpu.matmul %20, %21, %cst_8 {dimension_numbers = #tpu.dot_dimension_numbers<[1], [0], [0], [1], [0, 0, 1, 1], [], []>} : vector<8x128xf32>, vector<128x128xf32>, vector<8x128xf32> -> vector<8x128xf32>
    %c0_9 = arith.constant 0 : index
    %c0_10 = arith.constant 0 : index
    %23 = vector.load %arg5[%c0_9, %c0_10] : memref<72x128xf32, #tpu.memory_space<vmem>>, vector<72x128xf32>
    %cst_11 = arith.constant dense<0.000000e+00> : vector<8x128xf32>
    %24 = tpu.matmul %0, %23, %cst_11 {dimension_numbers = #tpu.dot_dimension_numbers<[1], [0], [0], [1], [0, 0, 1, 1], [], []>} : vector<8x72xf32>, vector<72x128xf32>, vector<8x128xf32> -> vector<8x128xf32>
    %25 = arith.addf %22, %24 : vector<8x128xf32>
    %26 = arith.mulf %25, %25 : vector<8x128xf32>
    %c0_12 = arith.constant 0 : index
    %c0_13 = arith.constant 0 : index
    %27 = vector.load %arg6[%c0_12, %c0_13] : memref<128x8xf32, #tpu.memory_space<vmem>>, vector<128x8xf32>
    %cst_14 = arith.constant dense<0.000000e+00> : vector<8x8xf32>
    %28 = tpu.matmul %26, %27, %cst_14 {dimension_numbers = #tpu.dot_dimension_numbers<[1], [0], [0], [1], [0, 0, 1, 1], [], []>} : vector<8x128xf32>, vector<128x8xf32>, vector<8x8xf32> -> vector<8x8xf32>
    %29 = arith.mulf %28, %28 : vector<8x8xf32>
    %cst_15 = arith.constant 1.000000e-16 : f32
    %30 = vector.broadcast %cst_15 : f32 to vector<8x8xf32>
    %31 = arith.addf %29, %30 : vector<8x8xf32>
    %32 = math.sqrt %31 : vector<8x8xf32>
    %33 = math.sqrt %32 : vector<8x8xf32>
    %cst_16 = arith.constant dense<0.000000e+00> : vector<8xf32>
    %34 = vector.multi_reduction <add>, %33, %cst_16 [1] : vector<8x8xf32> to vector<8xf32>
    %35 = vector.shape_cast %34 : vector<8xf32> to vector<8x1xf32>
    %cst_17 = arith.constant 8.000000e+00 : f32
    %36 = vector.broadcast %cst_17 : f32 to vector<8x1xf32>
    %37 = arith.divf %35, %36 : vector<8x1xf32>
    %cst_18 = arith.constant 9.99999997E-7 : f32
    %38 = vector.broadcast %cst_18 : f32 to vector<8x1xf32>
    %39 = arith.addf %37, %38 : vector<8x1xf32>
    %40 = tpu.reciprocal %39 {approx = true} : vector<8x1xf32> -> vector<8x1xf32>
    %c0_19 = arith.constant 0 : index
    %c0_20 = arith.constant 0 : index
    %41 = vector.load %arg7[%c0_19, %c0_20] : memref<1x128xf32, #tpu.memory_space<vmem>>, vector<1x128xf32>
    %42 = vector.broadcast %41 : vector<1x128xf32> to vector<8x128xf32>
    %43 = arith.mulf %25, %42 : vector<8x128xf32>
    %44 = vector.broadcast %40 : vector<8x1xf32> to vector<8x128xf32>
    %45 = arith.mulf %43, %44 : vector<8x128xf32>
    %c0_21 = arith.constant 0 : index
    %c0_22 = arith.constant 0 : index
    %46 = vector.load %arg8[%c0_21, %c0_22] : memref<8x128xf32, #tpu.memory_space<vmem>>, vector<8x128xf32>
    tpu.vector_store %arg8[%c0_21, %c0_22], %45 {strides = array<i32>} : memref<8x128xf32, #tpu.memory_space<vmem>>, vector<8x128xf32>,
    return
  }
  func.func @transform_0(%arg0: i32) -> (i32, i32) {
    %c0_i32 = arith.constant 0 : i32
    %c0_i32_0 = arith.constant 0 : i32
    return %arg0, %c0_i32 : i32, i32
  }
  func.func @transform_1(%arg0: i32) -> (i32, i32) {
    %c0_i32 = arith.constant 0 : i32
    %c0_i32_0 = arith.constant 0 : i32
    %c0_i32_1 = arith.constant 0 : i32
    return %c0_i32, %c0_i32_0 : i32, i32
  }
  func.func @transform_2(%arg0: i32) -> (i32, i32) {
    %c0_i32 = arith.constant 0 : i32
    %c0_i32_0 = arith.constant 0 : i32
    %c0_i32_1 = arith.constant 0 : i32
    return %c0_i32, %c0_i32_0 : i32, i32
  }
  func.func @transform_3(%arg0: i32) -> (i32, i32) {
    %c0_i32 = arith.constant 0 : i32
    %c0_i32_0 = arith.constant 0 : i32
    %c0_i32_1 = arith.constant 0 : i32
    return %c0_i32, %c0_i32_0 : i32, i32
  }
  func.func @transform_4(%arg0: i32) -> (i32, i32) {
    %c0_i32 = arith.constant 0 : i32
    %c0_i32_0 = arith.constant 0 : i32
    %c0_i32_1 = arith.constant 0 : i32
    return %c0_i32, %c0_i32_0 : i32, i32
  }
  func.func @transform_5(%arg0: i32) -> (i32, i32) {
    %c0_i32 = arith.constant 0 : i32
    %c0_i32_0 = arith.constant 0 : i32
    %c0_i32_1 = arith.constant 0 : i32
    return %c0_i32, %c0_i32_0 : i32, i32
  }
  func.func @transform_6(%arg0: i32) -> (i32, i32) {
    %c0_i32 = arith.constant 0 : i32
    %c0_i32_0 = arith.constant 0 : i32
    %c0_i32_1 = arith.constant 0 : i32
    return %c0_i32, %c0_i32_0 : i32, i32
  }
  func.func @transform_7(%arg0: i32) -> (i32, i32) {
    %c0_i32 = arith.constant 0 : i32
    %c0_i32_0 = arith.constant 0 : i32
    return %arg0, %c0_i32 : i32, i32
  }
}

</mosaic_0001>

<llo_original>
// kernel: tpu_custom_call.1
$region0: #{tpu_custom_call.1}
  #allocation0 [shape = 'u32[]', space=smem, size = 0x4, offset = 0x4, fixed_abs, tag = 'smem constant byte address 0x4 - core index']
  #allocation1 [shape = 'u32[144,128]{1,0:T(1,128)}', space=vmem, size = 0x12000, scoped, tag = 'internal scratch']
  %s0 = inlined_call_operand.vmem [shape: f32[16,72], index: 0, kind: input, shape index: {}]
  %s1 = inlined_call_operand.hbm [shape: f32[72,1024], index: 1, kind: input, shape index: {}]
  %s2 = inlined_call_operand.hbm [shape: f32[72,1024], index: 2, kind: input, shape index: {}]
  %s3 = inlined_call_operand.vmem [shape: f32[128,128], index: 3, kind: input, shape index: {}]
  %s4 = inlined_call_operand.hbm [shape: f32[72,128], index: 4, kind: input, shape index: {}]
  %s5 = inlined_call_operand.vmem [shape: f32[128,8], index: 5, kind: input, shape index: {}]
  %s6 = inlined_call_operand.vmem [shape: f32[1,128], index: 6, kind: input, shape index: {}]
  %s7 = inlined_call_operand.hbm [shape: f32[16,128], index: 7, kind: output, shape index: {}]
  %s8 = sld [smem:[#allocation0]]
  $region73: #{tpu_custom_call.1} parent=0
    _
  %s10 = ssub.s32 1, %s8
  %s11 = scalar_select 0, %s10, %s8
  $region1: #{tpu_custom_call.1} parent=0
    #allocation2 [shape = 'u8[294912]{0}', space=vmem, size = 0x48000, scoped, tag = 'input window, operand 1, single buffered']
    #allocation3 [shape = 's32[2]{0}', space=sflag, size = 0x8, scoped, tag = 'scoped memory for tpu_custom_call.1']
    #allocation4 [shape = 's32[2]{0}', space=sflag, size = 0x8, scoped, tag = 'scoped memory for tpu_custom_call.1']
    #allocation5 [shape = 'u8[294912]{0}', space=vmem, size = 0x48000, scoped, tag = 'input window, operand 2, single buffered']
    #allocation6 [shape = 's32[1]{0}', space=sflag, size = 0x4, scoped, tag = 'scoped memory for tpu_custom_call.1']
    #allocation7 [shape = 'u8[36864]{0}', space=vmem, size = 0x9000, scoped, tag = 'input window, operand 4, single buffered']
    #allocation8 [shape = 'u8[8192]{0}', space=vmem, size = 0x2000, scoped, tag = 'output window, operand 0']
    %12 = vsyncpa [#allocation3], 0
    %13 = vsyncpa [#allocation6], 0
    %14 = vsyncpa [#allocation4], 0
    %s15 = scalar_lea.sflag [#allocation4], 1
    %16 = vsyncpa %s15, 0
    loop: start=0, step=1, limit=4
    $region2: #{tpu_custom_call.1} parent=1 // loop_pre_header
      _
    $region3: #{tpu_custom_call.1} parent=1 // loop_header
      %s18 = sphi 0, %s22
      %p19 = scmp.ge.s32.totalorder %s18, 4
      %s28 = sphi 0, %s30
      %s31 = sphi 0, %s28
      %s32 = sphi 0, %s31
      %s48 = sphi 0, %s32
      %s52 = sphi 0, %s52
      %s54 = sphi 0, %s52
      %s55 = sphi 0, %s54
      %s69 = sphi 0, %s55
      %s73 = sphi 0, %s73
      %s75 = sphi 0, %s73
      %s76 = sphi 0, %s75
      %s90 = sphi 0, %s76
      %s94 = sphi 0, %s94
      %s96 = sphi 0, %s94
      %s97 = sphi 0, %s96
      %s111 = sphi 0, %s97
      %s115 = sphi 0, %s115
      %s117 = sphi 0, %s115
      %s118 = sphi 0, %s117
      %s132 = sphi 0, %s118
      %s136 = sphi 0, %s136
      %s138 = sphi 0, %s136
      %s139 = sphi 0, %s138
      %s153 = sphi 0, %s139
      %s157 = sphi 0, %s157
      %s159 = sphi 0, %s157
      %s160 = sphi 0, %s159
      %s174 = sphi 0, %s160
      %s180 = sphi 0, %s182
      %s183 = sphi 0, %s180
      %s184 = sphi 0, %s183
      %s200 = sphi 0, %s184
    $region4: #{tpu_custom_call.1} parent=1 // loop_header_branch
      %21 = sbr.rel (%p19) target = $region8
    $region5: #{tpu_custom_call.1} parent=1 // loop_body
      %s23 = ssub.s32 %s18, 1
      %s24 = ssub.s32 %s18, 2
      %s25 = sadd.s32 %s18, 1
      %s26 = ssub.s32 %s18, %s25
      %p27 = scmp.eq.s32.totalorder %s26, 0
      %s29 = sadd.s32 %s28, 1
      %s30 = scalar_select %p27, %s28, %s29
      %p33 = pneg %p27
      %p34 = scmp.eq.s32.totalorder %s18, 1
      %p35 = por %p33, %p34
      %p36 = scmp.ne.s32.totalorder %s28, %s31
      %p37 = scmp.eq.s32.totalorder %s18, 0
      %p38 = por %p36, %p37
      %p39 = scmp.ne.s32.totalorder %s28, %s31
      %p40 = scmp.eq.s32.totalorder %s23, 1
      %p41 = por %p39, %p40
      %p42 = scmp.ne.s32.totalorder %s31, %s32
      %p43 = scmp.eq.s32.totalorder %s23, 0
      %p44 = por %p42, %p43
      %p45 = scmp.ne.s32.totalorder %s31, %s32
      %p46 = scmp.eq.s32.totalorder %s24, 1
      %p47 = por %p45, %p46
      %p49 = scmp.ne.s32.totalorder %s32, %s48
      %p50 = scmp.eq.s32.totalorder %s24, 0
      %p51 = por %p49, %p50
      %s53 = sadd.s32 %s52, 1
      %p56 = scmp.eq.s32.totalorder %s18, 1
      %p57 = scmp.ne.s32.totalorder %s52, %s54
      %p58 = scmp.eq.s32.totalorder %s18, 0
      %p59 = por %p57, %p58
      %p60 = scmp.ne.s32.totalorder %s52, %s54
      %p61 = scmp.eq.s32.totalorder %s23, 1
      %p62 = por %p60, %p61
      %p63 = scmp.ne.s32.totalorder %s54, %s55
      %p64 = scmp.eq.s32.totalorder %s23, 0
      %p65 = por %p63, %p64
      %p66 = scmp.ne.s32.totalorder %s54, %s55
      %p67 = scmp.eq.s32.totalorder %s24, 1
      %p68 = por %p66, %p67
      %p70 = scmp.ne.s32.totalorder %s55, %s69
      %p71 = scmp.eq.s32.totalorder %s24, 0
      %p72 = por %p70, %p71
      %s74 = sadd.s32 %s73, 1
      %p77 = scmp.eq.s32.totalorder %s18, 1
      %p78 = scmp.ne.s32.totalorder %s73, %s75
      %p79 = scmp.eq.s32.totalorder %s18, 0
      %p80 = por %p78, %p79
      %p81 = scmp.ne.s32.totalorder %s73, %s75
      %p82 = scmp.eq.s32.totalorder %s23, 1
      %p83 = por %p81, %p82
      %p84 = scmp.ne.s32.totalorder %s75, %s76
      %p85 = scmp.eq.s32.totalorder %s23, 0
      %p86 = por %p84, %p85
      %p87 = scmp.ne.s32.totalorder %s75, %s76
      %p88 = scmp.eq.s32.totalorder %s24, 1
      %p89 = por %p87, %p88
      %p91 = scmp.ne.s32.totalorder %s76, %s90
      %p92 = scmp.eq.s32.totalorder %s24, 0
      %p93 = por %p91, %p92
      %s95 = sadd.s32 %s94, 1
      %p98 = scmp.eq.s32.totalorder %s18, 1
      %p99 = scmp.ne.s32.totalorder %s94, %s96
      %p100 = scmp.eq.s32.totalorder %s18, 0
      %p101 = por %p99, %p100
      %p102 = scmp.ne.s32.totalorder %s94, %s96
      %p103 = scmp.eq.s32.totalorder %s23, 1
      %p104 = por %p102, %p103
      %p105 = scmp.ne.s32.totalorder %s96, %s97
      %p106 = scmp.eq.s32.totalorder %s23, 0
      %p107 = por %p105, %p106
      %p108 = scmp.ne.s32.totalorder %s96, %s97
      %p109 = scmp.eq.s32.totalorder %s24, 1
      %p110 = por %p108, %p109
      %p112 = scmp.ne.s32.totalorder %s97, %s111
      %p113 = scmp.eq.s32.totalorder %s24, 0
      %p114 = por %p112, %p113
      %s116 = sadd.s32 %s115, 1
      %p119 = scmp.eq.s32.totalorder %s18, 1
      %p120 = scmp.ne.s32.totalorder %s115, %s117
      %p121 = scmp.eq.s32.totalorder %s18, 0
      %p122 = por %p120, %p121
      %p123 = scmp.ne.s32.totalorder %s115, %s117
      %p124 = scmp.eq.s32.totalorder %s23, 1
      %p125 = por %p123, %p124
      %p126 = scmp.ne.s32.totalorder %s117, %s118
      %p127 = scmp.eq.s32.totalorder %s23, 0
      %p128 = por %p126, %p127
      %p129 = scmp.ne.s32.totalorder %s117, %s118
      %p130 = scmp.eq.s32.totalorder %s24, 1
      %p131 = por %p129, %p130
      %p133 = scmp.ne.s32.totalorder %s118, %s132
      %p134 = scmp.eq.s32.totalorder %s24, 0
      %p135 = por %p133, %p134
      %s137 = sadd.s32 %s136, 1
      %p140 = scmp.eq.s32.totalorder %s18, 1
      %p141 = scmp.ne.s32.totalorder %s136, %s138
      %p142 = scmp.eq.s32.totalorder %s18, 0
      %p143 = por %p141, %p142
      %p144 = scmp.ne.s32.totalorder %s136, %s138
      %p145 = scmp.eq.s32.totalorder %s23, 1
      %p146 = por %p144, %p145
      %p147 = scmp.ne.s32.totalorder %s138, %s139
      %p148 = scmp.eq.s32.totalorder %s23, 0
      %p149 = por %p147, %p148
      %p150 = scmp.ne.s32.totalorder %s138, %s139
      %p151 = scmp.eq.s32.totalorder %s24, 1
      %p152 = por %p150, %p151
      %p154 = scmp.ne.s32.totalorder %s139, %s153
      %p155 = scmp.eq.s32.totalorder %s24, 0
      %p156 = por %p154, %p155
      %s158 = sadd.s32 %s157, 1
      %p161 = scmp.eq.s32.totalorder %s18, 1
      %p162 = scmp.ne.s32.totalorder %s157, %s159
      %p163 = scmp.eq.s32.totalorder %s18, 0
      %p164 = por %p162, %p163
      %p165 = scmp.ne.s32.totalorder %s157, %s159
      %p166 = scmp.eq.s32.totalorder %s23, 1
      %p167 = por %p165, %p166
      %p168 = scmp.ne.s32.totalorder %s159, %s160
      %p169 = scmp.eq.s32.totalorder %s23, 0
      %p170 = por %p168, %p169
      %p171 = scmp.ne.s32.totalorder %s159, %s160
      %p172 = scmp.eq.s32.totalorder %s24, 1
      %p173 = por %p171, %p172
      %p175 = scmp.ne.s32.totalorder %s160, %s174
      %p176 = scmp.eq.s32.totalorder %s24, 0
      %p177 = por %p175, %p176
      %s178 = ssub.s32 %s18, %s25
      %p179 = scmp.eq.s32.totalorder %s178, 0
      %s181 = sadd.s32 %s180, 1
      %s182 = scalar_select %p179, %s180, %s181
      %p185 = pneg %p179
      %p186 = scmp.eq.s32.totalorder %s18, 1
      %p187 = por %p185, %p186
      %p188 = scmp.ne.s32.totalorder %s180, %s183
      %p189 = scmp.eq.s32.totalorder %s18, 0
      %p190 = por %p188, %p189
      %p191 = scmp.ne.s32.totalorder %s180, %s183
      %p192 = scmp.eq.s32.totalorder %s23, 1
      %p193 = por %p191, %p192
      %p194 = scmp.ne.s32.totalorder %s183, %s184
      %p195 = scmp.eq.s32.totalorder %s23, 0
      %p196 = por %p194, %p195
      %p197 = scmp.ne.s32.totalorder %s183, %s184
      %p198 = scmp.eq.s32.totalorder %s24, 1
      %p199 = por %p197, %p198
      %p201 = scmp.ne.s32.totalorder %s184, %s200
      %p202 = scmp.eq.s32.totalorder %s24, 0
      %p203 = por %p201, %p202
      %p204 = scmp.le.s32.totalorder 1, %s18
      %p205 = scmp.lt.s32.totalorder %s18, 3
      %p206 = pnand %p204, %p205
      %p207 = pneg %p206
      // Predicated region
      $region9: #{tpu_custom_call.1} parent=5 // pred_check
        _
      $region10: #{tpu_custom_call.1} parent=5 // pred_check_branch
        %209 = sbr.rel (%p206) target = $region12
      $region11: #{tpu_custom_call.1} parent=5 // pred_region
        %s210 = ssub.s32 %s18, 1
        // Predicated region
        $region13: #{tpu_custom_call.1} parent=11 // pred_check
          %p211 = pneg %p65
        $region14: #{tpu_custom_call.1} parent=11 // pred_check_branch
          %213 = sbr.rel (%p211) target = $region16
        $region15: #{tpu_custom_call.1} parent=11 // pred_region
          %s215 = ssub.s32 9216, 9216
          %216 = vsyncadd [#allocation3], %s215
          %s217 = sshll.u32 [#allocation2], 4
          %s218 = int_to_ptr.vmem [resolvable:$true] %s217
          %223 = dma.hbm_to_vmem [thread:$0]  %s1, 9216, %s218, [#allocation3], 1024, 1024, 64
        $region16: #{tpu_custom_call.1} parent=11 // pred_fallthru
          _
        // Predicated region
        $region17: #{tpu_custom_call.1} parent=11 // pred_check
          %p224 = pneg %p86
        $region18: #{tpu_custom_call.1} parent=11 // pred_check_branch
          %226 = sbr.rel (%p224) target = $region20
        $region19: #{tpu_custom_call.1} parent=11 // pred_region
          %s228 = ssub.s32 9216, 9216
          %229 = vsyncadd [#allocation6], %s228
          %s230 = sshll.u32 [#allocation5], 4
          %s231 = int_to_ptr.vmem [resolvable:$true] %s230
          %236 = dma.hbm_to_vmem [thread:$0]  %s2, 9216, %s231, [#allocation6], 1024, 1024, 64
        $region20: #{tpu_custom_call.1} parent=11 // pred_fallthru
          _
        // Predicated region
        $region21: #{tpu_custom_call.1} parent=11 // pred_check
          %p237 = pneg %p107
        $region22: #{tpu_custom_call.1} parent=11 // pred_check_branch
          %239 = sbr.rel (%p237) target = $region24
        $region23: #{tpu_custom_call.1} parent=11 // pred_region
          _
        $region24: #{tpu_custom_call.1} parent=11 // pred_fallthru
          _
        // Predicated region
        $region25: #{tpu_custom_call.1} parent=11 // pred_check
          %p240 = pneg %p128
        $region26: #{tpu_custom_call.1} parent=11 // pred_check_branch
          %242 = sbr.rel (%p240) target = $region28
        $region27: #{tpu_custom_call.1} parent=11 // pred_region
          %s244 = ssub.s32 1152, 1152
          %245 = vsyncadd [#allocation6], %s244
          %s246 = sshll.u32 [#allocation7], 4
          %s247 = int_to_ptr.vmem [resolvable:$true] %s246
          %252 = dma.hbm_to_vmem [thread:$0]  %s4, 1152, %s247, [#allocation6], 128, 128, 8
        $region28: #{tpu_custom_call.1} parent=11 // pred_fallthru
          _
        // Predicated region
        $region29: #{tpu_custom_call.1} parent=11 // pred_check
          %p253 = pneg %p149
        $region30: #{tpu_custom_call.1} parent=11 // pred_check_branch
          %255 = sbr.rel (%p253) target = $region32
        $region31: #{tpu_custom_call.1} parent=11 // pred_region
          _
        $region32: #{tpu_custom_call.1} parent=11 // pred_fallthru
          _
        // Predicated region
        $region33: #{tpu_custom_call.1} parent=11 // pred_check
          %p256 = pneg %p170
        $region34: #{tpu_custom_call.1} parent=11 // pred_check_branch
          %258 = sbr.rel (%p256) target = $region36
        $region35: #{tpu_custom_call.1} parent=11 // pred_region
          _
        $region36: #{tpu_custom_call.1} parent=11 // pred_fallthru
          _
      $region12: #{tpu_custom_call.1} parent=5 // pred_fallthru
        _
      %p259 = scmp.lt.s32.totalorder %s18, 2
      // Predicated region
      $region37: #{tpu_custom_call.1} parent=5 // pred_check
        %p260 = pneg %p259
      $region38: #{tpu_custom_call.1} parent=5 // pred_check_branch
        %262 = sbr.rel (%p260) target = $region40
      $region39: #{tpu_custom_call.1} parent=5 // pred_region
        // Predicated region
        $region41: #{tpu_custom_call.1} parent=39 // pred_check
          %p263 = pneg %p38
        $region42: #{tpu_custom_call.1} parent=39 // pred_check_branch
          %265 = sbr.rel (%p263) target = $region44
        $region43: #{tpu_custom_call.1} parent=39 // pred_region
          %p266 = scmp.lt.s32.totalorder %s18, 1
          %s267 = scalar_select %p266, %s18, 1
          %s268 = smul.addr %s267, 8
          %s269 = scalar_lea.vmem %s0, %s268
        $region44: #{tpu_custom_call.1} parent=39 // pred_fallthru
          _
      $region40: #{tpu_custom_call.1} parent=5 // pred_fallthru
        _
      %p270 = scmp.le.s32.totalorder 1, %s18
      %p271 = scmp.lt.s32.totalorder %s18, 3
      %p272 = pnand %p270, %p271
      %p273 = pneg %p272
      // Predicated region
      $region45: #{tpu_custom_call.1} parent=5 // pred_check
        _
      $region46: #{tpu_custom_call.1} parent=5 // pred_check_branch
        %275 = sbr.rel (%p272) target = $region48
      $region47: #{tpu_custom_call.1} parent=5 // pred_region
        %s276 = ssub.s32 %s18, 1
        // Predicated region
        $region49: #{tpu_custom_call.1} parent=47 // pred_check
          %p277 = pneg %p65
        $region50: #{tpu_custom_call.1} parent=47 // pred_check_branch
          %279 = sbr.rel (%p277) target = $region52
        $region51: #{tpu_custom_call.1} parent=47 // pred_region
          %280 = dma.done [#allocation3], 9216
        $region52: #{tpu_custom_call.1} parent=47 // pred_fallthru
          _
        // Predicated region
        $region53: #{tpu_custom_call.1} parent=47 // pred_check
          %p281 = pneg %p86
        $region54: #{tpu_custom_call.1} parent=47 // pred_check_branch
          %283 = sbr.rel (%p281) target = $region56
        $region55: #{tpu_custom_call.1} parent=47 // pred_region
          %284 = dma.done [#allocation6], 9216
        $region56: #{tpu_custom_call.1} parent=47 // pred_fallthru
          _
        // Predicated region
        $region57: #{tpu_custom_call.1} parent=47 // pred_check
          %p285 = pneg %p128
        $region58: #{tpu_custom_call.1} parent=47 // pred_check_branch
          %287 = sbr.rel (%p285) target = $region60
        $region59: #{tpu_custom_call.1} parent=47 // pred_region
          %288 = dma.done [#allocation6], 1152
        $region60: #{tpu_custom_call.1} parent=47 // pred_fallthru
          _
        %p289 = scmp.lt.s32.totalorder %s23, 1
        %s290 = scalar_select %p289, %s23, 1
        %s291 = smul.addr %s290, 8
        %s292 = scalar_lea.vmem %s0, %s291
        %p293 = pneg %p44
        %p294 = pneg %p41
        %p295 = pneg %p65
        %p296 = pneg %p62
        %p297 = pneg %p86
        %p298 = pneg %p83
        %p299 = pneg %p107
        %p300 = pneg %p104
        %p301 = pneg %p128
        %p302 = pneg %p125
        %p303 = pneg %p149
        %p304 = pneg %p146
        %p305 = pneg %p170
        %p306 = pneg %p167
        %p307 = pneg %p196
        %p308 = pneg %p193
        %s309 = sand.u32 %s183, 1
        %s310 = scalar_lea.sflag [#allocation4], %s309
        %s311 = sand.u32 %s183, 1
        %s312 = smul.addr %s311, 8
        %s313 = scalar_lea.vmem [#allocation8], %s312
        %p314 = scmp.lt.s32.totalorder %s23, 1
        %s315 = scalar_select %p314, %s23, 1
        %s316 = smul.addr %s315, 8
        %s317 = scalar_lea.vmem %s0, %s316
        %v318 = vld [vmem:[%s317] sm:$0xff]
        %v319 = vld [vmem:[#allocation2] sm:$0xff]
        %v320 = vld [vmem:[#allocation2 + $0x8] sm:$0xff]
        %v321 = vld [vmem:[#allocation2 + $0x10] sm:$0xff]
        %v322 = vld [vmem:[#allocation2 + $0x18] sm:$0xff]
        %v323 = vld [vmem:[#allocation2 + $0x20] sm:$0xff]
        %v324 = vld [vmem:[#allocation2 + $0x28] sm:$0xff]
        %v325 = vld [vmem:[#allocation2 + $0x30] sm:$0xff]
        %v326 = vld [vmem:[#allocation2 + $0x38] sm:$0xff]
        %v327 = vld [vmem:[#allocation2 + $0x40] sm:$0xff]
        %v328 = vld [vmem:[#allocation2 + $0x48] sm:$0xff]
        %v329 = vld [vmem:[#allocation2 + $0x50] sm:$0xff]
        %v330 = vld [vmem:[#allocation2 + $0x58] sm:$0xff]
        %v331 = vld [vmem:[#allocation2 + $0x60] sm:$0xff]
        %v332 = vld [vmem:[#allocation2 + $0x68] sm:$0xff]
        %v333 = vld [vmem:[#allocation2 + $0x70] sm:$0xff]
        %v334 = vld [vmem:[#allocation2 + $0x78] sm:$0xff]
        %v335 = vld [vmem:[#allocation2 + $0x80] sm:$0xff]
        %v336 = vld [vmem:[#allocation2 + $0x88] sm:$0xff]
        %v337 = vld [vmem:[#allocation2 + $0x90] sm:$0xff]
        %v338 = vld [vmem:[#allocation2 + $0x98] sm:$0xff]
        %v339 = vld [vmem:[#allocation2 + $0xa0] sm:$0xff]
        %v340 = vld [vmem:[#allocation2 + $0xa8] sm:$0xff]
        %v341 = vld [vmem:[#allocation2 + $0xb0] sm:$0xff]
        %v342 = vld [vmem:[#allocation2 + $0xb8] sm:$0xff]
        %v343 = vld [vmem:[#allocation2 + $0xc0] sm:$0xff]
        %v344 = vld [vmem:[#allocation2 + $0xc8] sm:$0xff]
        %v345 = vld [vmem:[#allocation2 + $0xd0] sm:$0xff]
        %v346 = vld [vmem:[#allocation2 + $0xd8] sm:$0xff]
        %v347 = vld [vmem:[#allocation2 + $0xe0] sm:$0xff]
        %v348 = vld [vmem:[#allocation2 + $0xe8] sm:$0xff]
        %v349 = vld [vmem:[#allocation2 + $0xf0] sm:$0xff]
        %v350 = vld [vmem:[#allocation2 + $0xf8] sm:$0xff]
        %v351 = vld [vmem:[#allocation2 + $0x100] sm:$0xff]
        %v352 = vld [vmem:[#allocation2 + $0x108] sm:$0xff]
        %v353 = vld [vmem:[#allocation2 + $0x110] sm:$0xff]
        %v354 = vld [vmem:[#allocation2 + $0x118] sm:$0xff]
        %v355 = vld [vmem:[#allocation2 + $0x120] sm:$0xff]
        %v356 = vld [vmem:[#allocation2 + $0x128] sm:$0xff]
        %v357 = vld [vmem:[#allocation2 + $0x130] sm:$0xff]
        %v358 = vld [vmem:[#allocation2 + $0x138] sm:$0xff]
        %v359 = vld [vmem:[#allocation2 + $0x140] sm:$0xff]
        %v360 = vld [vmem:[#allocation2 + $0x148] sm:$0xff]
        %v361 = vld [vmem:[#allocation2 + $0x150] sm:$0xff]
        %v362 = vld [vmem:[#allocation2 + $0x158] sm:$0xff]
        %v363 = vld [vmem:[#allocation2 + $0x160] sm:$0xff]
        %v364 = vld [vmem:[#allocation2 + $0x168] sm:$0xff]
        %v365 = vld [vmem:[#allocation2 + $0x170] sm:$0xff]
        %v366 = vld [vmem:[#allocation2 + $0x178] sm:$0xff]
        %v367 = vld [vmem:[#allocation2 + $0x180] sm:$0xff]
        %v368 = vld [vmem:[#allocation2 + $0x188] sm:$0xff]
        %v369 = vld [vmem:[#allocation2 + $0x190] sm:$0xff]
        %v370 = vld [vmem:[#allocation2 + $0x198] sm:$0xff]
        %v371 = vld [vmem:[#allocation2 + $0x1a0] sm:$0xff]
        %v372 = vld [vmem:[#allocation2 + $0x1a8] sm:$0xff]
        %v373 = vld [vmem:[#allocation2 + $0x1b0] sm:$0xff]
        %v374 = vld [vmem:[#allocation2 + $0x1b8] sm:$0xff]
        %v375 = vld [vmem:[#allocation2 + $0x1c0] sm:$0xff]
        %v376 = vld [vmem:[#allocation2 + $0x1c8] sm:$0xff]
        %v377 = vld [vmem:[#allocation2 + $0x1d0] sm:$0xff]
        %v378 = vld [vmem:[#allocation2 + $0x1d8] sm:$0xff]
        %v379 = vld [vmem:[#allocation2 + $0x1e0] sm:$0xff]
        %v380 = vld [vmem:[#allocation2 + $0x1e8] sm:$0xff]
        %v381 = vld [vmem:[#allocation2 + $0x1f0] sm:$0xff]
        %v382 = vld [vmem:[#allocation2 + $0x1f8] sm:$0xff]
        %v383 = vld [vmem:[#allocation2 + $0x200] sm:$0xff]
        %v384 = vld [vmem:[#allocation2 + $0x208] sm:$0xff]
        %v385 = vld [vmem:[#allocation2 + $0x210] sm:$0xff]
        %v386 = vld [vmem:[#allocation2 + $0x218] sm:$0xff]
        %v387 = vld [vmem:[#allocation2 + $0x220] sm:$0xff]
        %v388 = vld [vmem:[#allocation2 + $0x228] sm:$0xff]
        %v389 = vld [vmem:[#allocation2 + $0x230] sm:$0xff]
        %v390 = vld [vmem:[#allocation2 + $0x238] sm:$0xff]
        %vm391 = vcmask 588800
        %v393 = vsel %vm391, %v318, 0
        %395 = vmatprep.subr.mxu0 %v320
        %396 = vmatpush1.msra.mxu0 %v319
        %397 = vmatprep.subr.mxu0 %v328
        %398 = vmatpush1.msra.mxu0 %v327
        %399 = vmatprep.subr.mxu0 %v336
        %400 = vmatpush1.msra.mxu0 %v335
        %401 = vmatprep.subr.mxu0 %v344
        %402 = vmatpush1.msra.mxu0 %v343
        %403 = vmatprep.subr.mxu0 %v352
        %404 = vmatpush1.msra.mxu0 %v351
        %405 = vmatprep.subr.mxu0 %v360
        %406 = vmatpush1.msra.mxu0 %v359
        %407 = vmatprep.subr.mxu0 %v368
        %408 = vmatpush1.msra.mxu0 %v367
        %409 = vmatprep.subr.mxu0 %v376
        %410 = vmatpush1.msra.mxu0 %v375
        %411 = vmatprep.subr.mxu0 %v384
        %412 = vmatpush1.msra.mxu0 %v383
        %413 = vmatprep.subr.mxu0 0.0
        %414 = vmatpush1.msra.mxu0 0.0
        %415 = vmatprep.subr.mxu0 0.0
        %416 = vmatpush1.msra.mxu0 0.0
        %417 = vmatprep.subr.mxu0 0.0
        %418 = vmatpush1.msra.mxu0 0.0
        %419 = vmatprep.subr.mxu0 0.0
        %420 = vmatpush1.msra.mxu0 0.0
        %421 = vmatprep.subr.mxu0 0.0
        %422 = vmatpush1.msra.mxu0 0.0
        %423 = vmatprep.subr.mxu0 0.0
        %424 = vmatpush1.msra.mxu0 0.0
        %425 = vmatprep.subr.mxu0 0.0
        %426 = vmatpush1.msra.mxu0 0.0
        %427 = vmatprep.subr.mxu0 0.0
        %428 = vmatpush1.msra.mxu0 0.0
        %429 = vmatprep.subr.mxu0 0.0
        %430 = vmatpush1.msra.mxu0 0.0
        %431 = vmatprep.subr.mxu0 0.0
        %432 = vmatpush1.msra.mxu0 0.0
        %433 = vmatprep.subr.mxu0 0.0
        %434 = vmatpush1.msra.mxu0 0.0
        %435 = vmatprep.subr.mxu0 0.0
        %436 = vmatpush1.msra.mxu0 0.0
        %437 = vmatprep.subr.mxu0 0.0
        %438 = vmatpush1.msra.mxu0 0.0
        %439 = vmatprep.subr.mxu0 0.0
        %440 = vmatpush1.msra.mxu0 0.0
        %441 = vmatprep.subr.mxu0 0.0
        %442 = vmatpush1.msra.mxu0 0.0
        %443 = vmatprep.subr.mxu0 0.0
        %444 = vmatpush1.msra.mxu0 0.0
        %445 = vmatprep.subr.mxu0 0.0
        %446 = vmatpush1.msra.mxu0 0.0
        %447 = vmatprep.subr.mxu0 0.0
        %448 = vmatpush1.msra.mxu0 0.0
        %449 = vmatprep.subr.mxu0 0.0
        %450 = vmatpush1.msra.mxu0 0.0
        %451 = vmatprep.subr.mxu0 0.0
        %452 = vmatpush1.msra.mxu0 0.0
        %453 = vmatprep.subr.mxu0 0.0
        %454 = vmatpush1.msra.mxu0 0.0
        %455 = vmatprep.subr.mxu0 0.0
        %456 = vmatpush1.msra.mxu0 0.0
        %457 = vmatprep.subr.mxu0 0.0
        %458 = vmatpush1.msra.mxu0 0.0
        %459 = vmatprep.mubr.f32.mxu0 0.0
        %460 = vmatmul.mubr.f32.gmra.mrb[0].mxu0 %v393
        %v461 = vpop.f32.mrb[0].mxu0
        %v462 = vadd.f32 0.0, %v461
        %v463 = vpop.f32.mrb[0].mxu0
        %v464 = vadd.f32 0.0, %v463
        %465 = vdwg.mxu0
        %466 = vmatprep.subr.mxu0 %v322
        %467 = vmatpush1.msra.mxu0 %v321
        %468 = vmatprep.subr.mxu0 %v330
        %469 = vmatpush1.msra.mxu0 %v329
        %470 = vmatprep.subr.mxu0 %v338
        %471 = vmatpush1.msra.mxu0 %v337
        %472 = vmatprep.subr.mxu0 %v346
        %473 = vmatpush1.msra.mxu0 %v345
        %474 = vmatprep.subr.mxu0 %v354
        %475 = vmatpush1.msra.mxu0 %v353
        %476 = vmatprep.subr.mxu0 %v362
        %477 = vmatpush1.msra.mxu0 %v361
        %478 = vmatprep.subr.mxu0 %v370
        %479 = vmatpush1.msra.mxu0 %v369
        %480 = vmatprep.subr.mxu0 %v378
        %481 = vmatpush1.msra.mxu0 %v377
        %482 = vmatprep.subr.mxu0 %v386
        %483 = vmatpush1.msra.mxu0 %v385
        %484 = vmatprep.subr.mxu0 0.0
        %485 = vmatpush1.msra.mxu0 0.0
        %486 = vmatprep.subr.mxu0 0.0
        %487 = vmatpush1.msra.mxu0 0.0
        %488 = vmatprep.subr.mxu0 0.0
        %489 = vmatpush1.msra.mxu0 0.0
        %490 = vmatprep.subr.mxu0 0.0
        %491 = vmatpush1.msra.mxu0 0.0
        %492 = vmatprep.subr.mxu0 0.0
        %493 = vmatpush1.msra.mxu0 0.0
        %494 = vmatprep.subr.mxu0 0.0
        %495 = vmatpush1.msra.mxu0 0.0
        %496 = vmatprep.subr.mxu0 0.0
        %497 = vmatpush1.msra.mxu0 0.0
        %498 = vmatprep.subr.mxu0 0.0
        %499 = vmatpush1.msra.mxu0 0.0
        %500 = vmatprep.subr.mxu0 0.0
        %501 = vmatpush1.msra.mxu0 0.0
        %502 = vmatprep.subr.mxu0 0.0
        %503 = vmatpush1.msra.mxu0 0.0
        %504 = vmatprep.subr.mxu0 0.0
        %505 = vmatpush1.msra.mxu0 0.0
        %506 = vmatprep.subr.mxu0 0.0
        %507 = vmatpush1.msra.mxu0 0.0
        %508 = vmatprep.subr.mxu0 0.0
        %509 = vmatpush1.msra.mxu0 0.0
        %510 = vmatprep.subr.mxu0 0.0
        %511 = vmatpush1.msra.mxu0 0.0
        %512 = vmatprep.subr.mxu0 0.0
        %513 = vmatpush1.msra.mxu0 0.0
        %514 = vmatprep.subr.mxu0 0.0
        %515 = vmatpush1.msra.mxu0 0.0
        %516 = vmatprep.subr.mxu0 0.0
        %517 = vmatpush1.msra.mxu0 0.0
        %518 = vmatprep.subr.mxu0 0.0
        %519 = vmatpush1.msra.mxu0 0.0
        %520 = vmatprep.subr.mxu0 0.0
        %521 = vmatpush1.msra.mxu0 0.0
        %522 = vmatprep.subr.mxu0 0.0
        %523 = vmatpush1.msra.mxu0 0.0
        %524 = vmatprep.subr.mxu0 0.0
        %525 = vmatpush1.msra.mxu0 0.0
        %526 = vmatprep.subr.mxu0 0.0
        %527 = vmatpush1.msra.mxu0 0.0
        %528 = vmatprep.subr.mxu0 0.0
        %529 = vmatpush1.msra.mxu0 0.0
        %530 = vmatprep.mubr.f32.mxu0 0.0
        %531 = vmatmul.mubr.f32.gmra.mrb[0].mxu0 %v393
        %v532 = vpop.f32.mrb[0].mxu0
        %v533 = vadd.f32 0.0, %v532
        %v534 = vpop.f32.mrb[0].mxu0
        %v535 = vadd.f32 0.0, %v534
        %536 = vdwg.mxu0
        %537 = vmatprep.subr.mxu0 %v324
        %538 = vmatpush1.msra.mxu0 %v323
        %539 = vmatprep.subr.mxu0 %v332
        %540 = vmatpush1.msra.mxu0 %v331
        %541 = vmatprep.subr.mxu0 %v340
        %542 = vmatpush1.msra.mxu0 %v339
        %543 = vmatprep.subr.mxu0 %v348
        %544 = vmatpush1.msra.mxu0 %v347
        %545 = vmatprep.subr.mxu0 %v356
        %546 = vmatpush1.msra.mxu0 %v355
        %547 = vmatprep.subr.mxu0 %v364
        %548 = vmatpush1.msra.mxu0 %v363
        %549 = vmatprep.subr.mxu0 %v372
        %550 = vmatpush1.msra.mxu0 %v371
        %551 = vmatprep.subr.mxu0 %v380
        %552 = vmatpush1.msra.mxu0 %v379
        %553 = vmatprep.subr.mxu0 %v388
        %554 = vmatpush1.msra.mxu0 %v387
        %555 = vmatprep.subr.mxu0 0.0
        %556 = vmatpush1.msra.mxu0 0.0
        %557 = vmatprep.subr.mxu0 0.0
        %558 = vmatpush1.msra.mxu0 0.0
        %559 = vmatprep.subr.mxu0 0.0
        %560 = vmatpush1.msra.mxu0 0.0
        %561 = vmatprep.subr.mxu0 0.0
        %562 = vmatpush1.msra.mxu0 0.0
        %563 = vmatprep.subr.mxu0 0.0
        %564 = vmatpush1.msra.mxu0 0.0
        %565 = vmatprep.subr.mxu0 0.0
        %566 = vmatpush1.msra.mxu0 0.0
        %567 = vmatprep.subr.mxu0 0.0
        %568 = vmatpush1.msra.mxu0 0.0
        %569 = vmatprep.subr.mxu0 0.0
        %570 = vmatpush1.msra.mxu0 0.0
        %571 = vmatprep.subr.mxu0 0.0
        %572 = vmatpush1.msra.mxu0 0.0
        %573 = vmatprep.subr.mxu0 0.0
        %574 = vmatpush1.msra.mxu0 0.0
        %575 = vmatprep.subr.mxu0 0.0
        %576 = vmatpush1.msra.mxu0 0.0
        %577 = vmatprep.subr.mxu0 0.0
        %578 = vmatpush1.msra.mxu0 0.0
        %579 = vmatprep.subr.mxu0 0.0
        %580 = vmatpush1.msra.mxu0 0.0
        %581 = vmatprep.subr.mxu0 0.0
        %582 = vmatpush1.msra.mxu0 0.0
        %583 = vmatprep.subr.mxu0 0.0
        %584 = vmatpush1.msra.mxu0 0.0
        %585 = vmatprep.subr.mxu0 0.0
        %586 = vmatpush1.msra.mxu0 0.0
        %587 = vmatprep.subr.mxu0 0.0
        %588 = vmatpush1.msra.mxu0 0.0
        %589 = vmatprep.subr.mxu0 0.0
        %590 = vmatpush1.msra.mxu0 0.0
        %591 = vmatprep.subr.mxu0 0.0
        %592 = vmatpush1.msra.mxu0 0.0
        %593 = vmatprep.subr.mxu0 0.0
        %594 = vmatpush1.msra.mxu0 0.0
        %595 = vmatprep.subr.mxu0 0.0
        %596 = vmatpush1.msra.mxu0 0.0
        %597 = vmatprep.subr.mxu0 0.0
        %598 = vmatpush1.msra.mxu0 0.0
        %599 = vmatprep.subr.mxu0 0.0
        %600 = vmatpush1.msra.mxu0 0.0
        %601 = vmatprep.mubr.f32.mxu0 0.0
        %602 = vmatmul.mubr.f32.gmra.mrb[0].mxu0 %v393
        %v603 = vpop.f32.mrb[0].mxu0
        %v604 = vadd.f32 0.0, %v603
        %v605 = vpop.f32.mrb[0].mxu0
        %v606 = vadd.f32 0.0, %v605
        %607 = vdwg.mxu0
        %608 = vmatprep.subr.mxu0 %v326
        %609 = vmatpush1.msra.mxu0 %v325
        %610 = vmatprep.subr.mxu0 %v334
        %611 = vmatpush1.msra.mxu0 %v333
        %612 = vmatprep.subr.mxu0 %v342
        %613 = vmatpush1.msra.mxu0 %v341
        %614 = vmatprep.subr.mxu0 %v350
        %615 = vmatpush1.msra.mxu0 %v349
        %616 = vmatprep.subr.mxu0 %v358
        %617 = vmatpush1.msra.mxu0 %v357
        %618 = vmatprep.subr.mxu0 %v366
        %619 = vmatpush1.msra.mxu0 %v365
        %620 = vmatprep.subr.mxu0 %v374
        %621 = vmatpush1.msra.mxu0 %v373
        %622 = vmatprep.subr.mxu0 %v382
        %623 = vmatpush1.msra.mxu0 %v381
        %624 = vmatprep.subr.mxu0 %v390
        %625 = vmatpush1.msra.mxu0 %v389
        %626 = vmatprep.subr.mxu0 0.0
        %627 = vmatpush1.msra.mxu0 0.0
        %628 = vmatprep.subr.mxu0 0.0
        %629 = vmatpush1.msra.mxu0 0.0
        %630 = vmatprep.subr.mxu0 0.0
        %631 = vmatpush1.msra.mxu0 0.0
        %632 = vmatprep.subr.mxu0 0.0
        %633 = vmatpush1.msra.mxu0 0.0
        %634 = vmatprep.subr.mxu0 0.0
        %635 = vmatpush1.msra.mxu0 0.0
        %636 = vmatprep.subr.mxu0 0.0
        %637 = vmatpush1.msra.mxu0 0.0
        %638 = vmatprep.subr.mxu0 0.0
        %639 = vmatpush1.msra.mxu0 0.0
        %640 = vmatprep.subr.mxu0 0.0
        %641 = vmatpush1.msra.mxu0 0.0
        %642 = vmatprep.subr.mxu0 0.0
        %643 = vmatpush1.msra.mxu0 0.0
        %644 = vmatprep.subr.mxu0 0.0
        %645 = vmatpush1.msra.mxu0 0.0
        %646 = vmatprep.subr.mxu0 0.0
        %647 = vmatpush1.msra.mxu0 0.0
        %648 = vmatprep.subr.mxu0 0.0
        %649 = vmatpush1.msra.mxu0 0.0
        %650 = vmatprep.subr.mxu0 0.0
        %651 = vmatpush1.msra.mxu0 0.0
        %652 = vmatprep.subr.mxu0 0.0
        %653 = vmatpush1.msra.mxu0 0.0
        %654 = vmatprep.subr.mxu0 0.0
        %655 = vmatpush1.msra.mxu0 0.0
        %656 = vmatprep.subr.mxu0 0.0
        %657 = vmatpush1.msra.mxu0 0.0
        %658 = vmatprep.subr.mxu0 0.0
        %659 = vmatpush1.msra.mxu0 0.0
        %660 = vmatprep.subr.mxu0 0.0
        %661 = vmatpush1.msra.mxu0 0.0
        %662 = vmatprep.subr.mxu0 0.0
        %663 = vmatpush1.msra.mxu0 0.0
        %664 = vmatprep.subr.mxu0 0.0
        %665 = vmatpush1.msra.mxu0 0.0
        %666 = vmatprep.subr.mxu0 0.0
        %667 = vmatpush1.msra.mxu0 0.0
        %668 = vmatprep.subr.mxu0 0.0
        %669 = vmatpush1.msra.mxu0 0.0
        %670 = vmatprep.subr.mxu0 0.0
        %671 = vmatpush1.msra.mxu0 0.0
        %672 = vmatprep.mubr.f32.mxu0 0.0
        %673 = vmatmul.mubr.f32.gmra.mrb[0].mxu0 %v393
        %v674 = vpop.f32.mrb[0].mxu0
        %v675 = vadd.f32 0.0, %v674
        %v676 = vpop.f32.mrb[0].mxu0
        %v677 = vadd.f32 0.0, %v676
        %678 = vdwg.mxu0
        %v679 = vld [vmem:[#allocation5] sm:$0xff]
        %v680 = vld [vmem:[#allocation5 + $0x8] sm:$0xff]
        %v681 = vld [vmem:[#allocation5 + $0x10] sm:$0xff]
        %v682 = vld [vmem:[#allocation5 + $0x18] sm:$0xff]
        %v683 = vld [vmem:[#allocation5 + $0x20] sm:$0xff]
        %v684 = vld [vmem:[#allocation5 + $0x28] sm:$0xff]
        %v685 = vld [vmem:[#allocation5 + $0x30] sm:$0xff]
        %v686 = vld [vmem:[#allocation5 + $0x38] sm:$0xff]
        %v687 = vld [vmem:[#allocation5 + $0x40] sm:$0xff]
        %v688 = vld [vmem:[#allocation5 + $0x48] sm:$0xff]
        %v689 = vld [vmem:[#allocation5 + $0x50] sm:$0xff]
        %v690 = vld [vmem:[#allocation5 + $0x58] sm:$0xff]
        %v691 = vld [vmem:[#allocation5 + $0x60] sm:$0xff]
        %v692 = vld [vmem:[#allocation5 + $0x68] sm:$0xff]
        %v693 = vld [vmem:[#allocation5 + $0x70] sm:$0xff]
        %v694 = vld [vmem:[#allocation5 + $0x78] sm:$0xff]
        %v695 = vld [vmem:[#allocation5 + $0x80] sm:$0xff]
        %v696 = vld [vmem:[#allocation5 + $0x88] sm:$0xff]
        %v697 = vld [vmem:[#allocation5 + $0x90] sm:$0xff]
        %v698 = vld [vmem:[#allocation5 + $0x98] sm:$0xff]
        %v699 = vld [vmem:[#allocation5 + $0xa0] sm:$0xff]
        %v700 = vld [vmem:[#allocation5 + $0xa8] sm:$0xff]
        %v701 = vld [vmem:[#allocation5 + $0xb0] sm:$0xff]
        %v702 = vld [vmem:[#allocation5 + $0xb8] sm:$0xff]
        %v703 = vld [vmem:[#allocation5 + $0xc0] sm:$0xff]
        %v704 = vld [vmem:[#allocation5 + $0xc8] sm:$0xff]
        %v705 = vld [vmem:[#allocation5 + $0xd0] sm:$0xff]
        %v706 = vld [vmem:[#allocation5 + $0xd8] sm:$0xff]
        %v707 = vld [vmem:[#allocation5 + $0xe0] sm:$0xff]
        %v708 = vld [vmem:[#allocation5 + $0xe8] sm:$0xff]
        %v709 = vld [vmem:[#allocation5 + $0xf0] sm:$0xff]
        %v710 = vld [vmem:[#allocation5 + $0xf8] sm:$0xff]
        %v711 = vld [vmem:[#allocation5 + $0x100] sm:$0xff]
        %v712 = vld [vmem:[#allocation5 + $0x108] sm:$0xff]
        %v713 = vld [vmem:[#allocation5 + $0x110] sm:$0xff]
        %v714 = vld [vmem:[#allocation5 + $0x118] sm:$0xff]
        %v715 = vld [vmem:[#allocation5 + $0x120] sm:$0xff]
        %v716 = vld [vmem:[#allocation5 + $0x128] sm:$0xff]
        %v717 = vld [vmem:[#allocation5 + $0x130] sm:$0xff]
        %v718 = vld [vmem:[#allocation5 + $0x138] sm:$0xff]
        %v719 = vld [vmem:[#allocation5 + $0x140] sm:$0xff]
        %v720 = vld [vmem:[#allocation5 + $0x148] sm:$0xff]
        %v721 = vld [vmem:[#allocation5 + $0x150] sm:$0xff]
        %v722 = vld [vmem:[#allocation5 + $0x158] sm:$0xff]
        %v723 = vld [vmem:[#allocation5 + $0x160] sm:$0xff]
        %v724 = vld [vmem:[#allocation5 + $0x168] sm:$0xff]
        %v725 = vld [vmem:[#allocation5 + $0x170] sm:$0xff]
        %v726 = vld [vmem:[#allocation5 + $0x178] sm:$0xff]
        %v727 = vld [vmem:[#allocation5 + $0x180] sm:$0xff]
        %v728 = vld [vmem:[#allocation5 + $0x188] sm:$0xff]
        %v729 = vld [vmem:[#allocation5 + $0x190] sm:$0xff]
        %v730 = vld [vmem:[#allocation5 + $0x198] sm:$0xff]
        %v731 = vld [vmem:[#allocation5 + $0x1a0] sm:$0xff]
        %v732 = vld [vmem:[#allocation5 + $0x1a8] sm:$0xff]
        %v733 = vld [vmem:[#allocation5 + $0x1b0] sm:$0xff]
        %v734 = vld [vmem:[#allocation5 + $0x1b8] sm:$0xff]
        %v735 = vld [vmem:[#allocation5 + $0x1c0] sm:$0xff]
        %v736 = vld [vmem:[#allocation5 + $0x1c8] sm:$0xff]
        %v737 = vld [vmem:[#allocation5 + $0x1d0] sm:$0xff]
        %v738 = vld [vmem:[#allocation5 + $0x1d8] sm:$0xff]
        %v739 = vld [vmem:[#allocation5 + $0x1e0] sm:$0xff]
        %v740 = vld [vmem:[#allocation5 + $0x1e8] sm:$0xff]
        %v741 = vld [vmem:[#allocation5 + $0x1f0] sm:$0xff]
        %v742 = vld [vmem:[#allocation5 + $0x1f8] sm:$0xff]
        %v743 = vld [vmem:[#allocation5 + $0x200] sm:$0xff]
        %v744 = vld [vmem:[#allocation5 + $0x208] sm:$0xff]
        %v745 = vld [vmem:[#allocation5 + $0x210] sm:$0xff]
        %v746 = vld [vmem:[#allocation5 + $0x218] sm:$0xff]
        %v747 = vld [vmem:[#allocation5 + $0x220] sm:$0xff]
        %v748 = vld [vmem:[#allocation5 + $0x228] sm:$0xff]
        %v749 = vld [vmem:[#allocation5 + $0x230] sm:$0xff]
        %v750 = vld [vmem:[#allocation5 + $0x238] sm:$0xff]
        %751 = vmatprep.subr.mxu0 %v680
        %752 = vmatpush1.msra.mxu0 %v679
        %753 = vmatprep.subr.mxu0 %v688
        %754 = vmatpush1.msra.mxu0 %v687
        %755 = vmatprep.subr.mxu0 %v696
        %756 = vmatpush1.msra.mxu0 %v695
        %757 = vmatprep.subr.mxu0 %v704
        %758 = vmatpush1.msra.mxu0 %v703
        %759 = vmatprep.subr.mxu0 %v712
        %760 = vmatpush1.msra.mxu0 %v711
        %761 = vmatprep.subr.mxu0 %v720
        %762 = vmatpush1.msra.mxu0 %v719
        %763 = vmatprep.subr.mxu0 %v728
        %764 = vmatpush1.msra.mxu0 %v727
        %765 = vmatprep.subr.mxu0 %v736
        %766 = vmatpush1.msra.mxu0 %v735
        %767 = vmatprep.subr.mxu0 %v744
        %768 = vmatpush1.msra.mxu0 %v743
        %769 = vmatprep.subr.mxu0 0.0
        %770 = vmatpush1.msra.mxu0 0.0
        %771 = vmatprep.subr.mxu0 0.0
        %772 = vmatpush1.msra.mxu0 0.0
        %773 = vmatprep.subr.mxu0 0.0
        %774 = vmatpush1.msra.mxu0 0.0
        %775 = vmatprep.subr.mxu0 0.0
        %776 = vmatpush1.msra.mxu0 0.0
        %777 = vmatprep.subr.mxu0 0.0
        %778 = vmatpush1.msra.mxu0 0.0
        %779 = vmatprep.subr.mxu0 0.0
        %780 = vmatpush1.msra.mxu0 0.0
        %781 = vmatprep.subr.mxu0 0.0
        %782 = vmatpush1.msra.mxu0 0.0
        %783 = vmatprep.subr.mxu0 0.0
        %784 = vmatpush1.msra.mxu0 0.0
        %785 = vmatprep.subr.mxu0 0.0
        %786 = vmatpush1.msra.mxu0 0.0
        %787 = vmatprep.subr.mxu0 0.0
        %788 = vmatpush1.msra.mxu0 0.0
        %789 = vmatprep.subr.mxu0 0.0
        %790 = vmatpush1.msra.mxu0 0.0
        %791 = vmatprep.subr.mxu0 0.0
        %792 = vmatpush1.msra.mxu0 0.0
        %793 = vmatprep.subr.mxu0 0.0
        %794 = vmatpush1.msra.mxu0 0.0
        %795 = vmatprep.subr.mxu0 0.0
        %796 = vmatpush1.msra.mxu0 0.0
        %797 = vmatprep.subr.mxu0 0.0
        %798 = vmatpush1.msra.mxu0 0.0
        %799 = vmatprep.subr.mxu0 0.0
        %800 = vmatpush1.msra.mxu0 0.0
        %801 = vmatprep.subr.mxu0 0.0
        %802 = vmatpush1.msra.mxu0 0.0
        %803 = vmatprep.subr.mxu0 0.0
        %804 = vmatpush1.msra.mxu0 0.0
        %805 = vmatprep.subr.mxu0 0.0
        %806 = vmatpush1.msra.mxu0 0.0
        %807 = vmatprep.subr.mxu0 0.0
        %808 = vmatpush1.msra.mxu0 0.0
        %809 = vmatprep.subr.mxu0 0.0
        %810 = vmatpush1.msra.mxu0 0.0
        %811 = vmatprep.subr.mxu0 0.0
        %812 = vmatpush1.msra.mxu0 0.0
        %813 = vmatprep.subr.mxu0 0.0
        %814 = vmatpush1.msra.mxu0 0.0
        %815 = vmatprep.mubr.f32.mxu0 0.0
        %816 = vmatmul.mubr.f32.gmra.mrb[0].mxu0 %v393
        %v817 = vpop.f32.mrb[0].mxu0
        %v818 = vadd.f32 0.0, %v817
        %v819 = vpop.f32.mrb[0].mxu0
        %v820 = vadd.f32 0.0, %v819
        %821 = vdwg.mxu0
        %822 = vmatprep.subr.mxu0 %v682
        %823 = vmatpush1.msra.mxu0 %v681
        %824 = vmatprep.subr.mxu0 %v690
        %825 = vmatpush1.msra.mxu0 %v689
        %826 = vmatprep.subr.mxu0 %v698
        %827 = vmatpush1.msra.mxu0 %v697
        %828 = vmatprep.subr.mxu0 %v706
        %829 = vmatpush1.msra.mxu0 %v705
        %830 = vmatprep.subr.mxu0 %v714
        %831 = vmatpush1.msra.mxu0 %v713
        %832 = vmatprep.subr.mxu0 %v722
        %833 = vmatpush1.msra.mxu0 %v721
        %834 = vmatprep.subr.mxu0 %v730
        %835 = vmatpush1.msra.mxu0 %v729
        %836 = vmatprep.subr.mxu0 %v738
        %837 = vmatpush1.msra.mxu0 %v737
        %838 = vmatprep.subr.mxu0 %v746
        %839 = vmatpush1.msra.mxu0 %v745
        %840 = vmatprep.subr.mxu0 0.0
        %841 = vmatpush1.msra.mxu0 0.0
        %842 = vmatprep.subr.mxu0 0.0
        %843 = vmatpush1.msra.mxu0 0.0
        %844 = vmatprep.subr.mxu0 0.0
        %845 = vmatpush1.msra.mxu0 0.0
        %846 = vmatprep.subr.mxu0 0.0
        %847 = vmatpush1.msra.mxu0 0.0
        %848 = vmatprep.subr.mxu0 0.0
        %849 = vmatpush1.msra.mxu0 0.0
        %850 = vmatprep.subr.mxu0 0.0
        %851 = vmatpush1.msra.mxu0 0.0
        %852 = vmatprep.subr.mxu0 0.0
        %853 = vmatpush1.msra.mxu0 0.0
        %854 = vmatprep.subr.mxu0 0.0
        %855 = vmatpush1.msra.mxu0 0.0
        %856 = vmatprep.subr.mxu0 0.0
        %857 = vmatpush1.msra.mxu0 0.0
        %858 = vmatprep.subr.mxu0 0.0
        %859 = vmatpush1.msra.mxu0 0.0
        %860 = vmatprep.subr.mxu0 0.0
        %861 = vmatpush1.msra.mxu0 0.0
        %862 = vmatprep.subr.mxu0 0.0
        %863 = vmatpush1.msra.mxu0 0.0
        %864 = vmatprep.subr.mxu0 0.0
        %865 = vmatpush1.msra.mxu0 0.0
        %866 = vmatprep.subr.mxu0 0.0
        %867 = vmatpush1.msra.mxu0 0.0
        %868 = vmatprep.subr.mxu0 0.0
        %869 = vmatpush1.msra.mxu0 0.0
        %870 = vmatprep.subr.mxu0 0.0
        %871 = vmatpush1.msra.mxu0 0.0
        %872 = vmatprep.subr.mxu0 0.0
        %873 = vmatpush1.msra.mxu0 0.0
        %874 = vmatprep.subr.mxu0 0.0
        %875 = vmatpush1.msra.mxu0 0.0
        %876 = vmatprep.subr.mxu0 0.0
        %877 = vmatpush1.msra.mxu0 0.0
        %878 = vmatprep.subr.mxu0 0.0
        %879 = vmatpush1.msra.mxu0 0.0
        %880 = vmatprep.subr.mxu0 0.0
        %881 = vmatpush1.msra.mxu0 0.0
        %882 = vmatprep.subr.mxu0 0.0
        %883 = vmatpush1.msra.mxu0 0.0
        %884 = vmatprep.subr.mxu0 0.0
        %885 = vmatpush1.msra.mxu0 0.0
        %886 = vmatprep.mubr.f32.mxu0 0.0
        %887 = vmatmul.mubr.f32.gmra.mrb[0].mxu0 %v393
        %v888 = vpop.f32.mrb[0].mxu0
        %v889 = vadd.f32 0.0, %v888
        %v890 = vpop.f32.mrb[0].mxu0
        %v891 = vadd.f32 0.0, %v890
        %892 = vdwg.mxu0
        %893 = vmatprep.subr.mxu0 %v684
        %894 = vmatpush1.msra.mxu0 %v683
        %895 = vmatprep.subr.mxu0 %v692
        %896 = vmatpush1.msra.mxu0 %v691
        %897 = vmatprep.subr.mxu0 %v700
        %898 = vmatpush1.msra.mxu0 %v699
        %899 = vmatprep.subr.mxu0 %v708
        %900 = vmatpush1.msra.mxu0 %v707
        %901 = vmatprep.subr.mxu0 %v716
        %902 = vmatpush1.msra.mxu0 %v715
        %903 = vmatprep.subr.mxu0 %v724
        %904 = vmatpush1.msra.mxu0 %v723
        %905 = vmatprep.subr.mxu0 %v732
        %906 = vmatpush1.msra.mxu0 %v731
        %907 = vmatprep.subr.mxu0 %v740
        %908 = vmatpush1.msra.mxu0 %v739
        %909 = vmatprep.subr.mxu0 %v748
        %910 = vmatpush1.msra.mxu0 %v747
        %911 = vmatprep.subr.mxu0 0.0
        %912 = vmatpush1.msra.mxu0 0.0
        %913 = vmatprep.subr.mxu0 0.0
        %914 = vmatpush1.msra.mxu0 0.0
        %915 = vmatprep.subr.mxu0 0.0
        %916 = vmatpush1.msra.mxu0 0.0
        %917 = vmatprep.subr.mxu0 0.0
        %918 = vmatpush1.msra.mxu0 0.0
        %919 = vmatprep.subr.mxu0 0.0
        %920 = vmatpush1.msra.mxu0 0.0
        %921 = vmatprep.subr.mxu0 0.0
        %922 = vmatpush1.msra.mxu0 0.0
        %923 = vmatprep.subr.mxu0 0.0
        %924 = vmatpush1.msra.mxu0 0.0
        %925 = vmatprep.subr.mxu0 0.0
        %926 = vmatpush1.msra.mxu0 0.0
        %927 = vmatprep.subr.mxu0 0.0
        %928 = vmatpush1.msra.mxu0 0.0
        %929 = vmatprep.subr.mxu0 0.0
        %930 = vmatpush1.msra.mxu0 0.0
        %931 = vmatprep.subr.mxu0 0.0
        %932 = vmatpush1.msra.mxu0 0.0
        %933 = vmatprep.subr.mxu0 0.0
        %934 = vmatpush1.msra.mxu0 0.0
        %935 = vmatprep.subr.mxu0 0.0
        %936 = vmatpush1.msra.mxu0 0.0
        %937 = vmatprep.subr.mxu0 0.0
        %938 = vmatpush1.msra.mxu0 0.0
        %939 = vmatprep.subr.mxu0 0.0
        %940 = vmatpush1.msra.mxu0 0.0
        %941 = vmatprep.subr.mxu0 0.0
        %942 = vmatpush1.msra.mxu0 0.0
        %943 = vmatprep.subr.mxu0 0.0
        %944 = vmatpush1.msra.mxu0 0.0
        %945 = vmatprep.subr.mxu0 0.0
        %946 = vmatpush1.msra.mxu0 0.0
        %947 = vmatprep.subr.mxu0 0.0
        %948 = vmatpush1.msra.mxu0 0.0
        %949 = vmatprep.subr.mxu0 0.0
        %950 = vmatpush1.msra.mxu0 0.0
        %951 = vmatprep.subr.mxu0 0.0
        %952 = vmatpush1.msra.mxu0 0.0
        %953 = vmatprep.subr.mxu0 0.0
        %954 = vmatpush1.msra.mxu0 0.0
        %955 = vmatprep.subr.mxu0 0.0
        %956 = vmatpush1.msra.mxu0 0.0
        %957 = vmatprep.mubr.f32.mxu0 0.0
        %958 = vmatmul.mubr.f32.gmra.mrb[0].mxu0 %v393
        %v959 = vpop.f32.mrb[0].mxu0
        %v960 = vadd.f32 0.0, %v959
        %v961 = vpop.f32.mrb[0].mxu0
        %v962 = vadd.f32 0.0, %v961
        %963 = vdwg.mxu0
        %964 = vmatprep.subr.mxu0 %v686
        %965 = vmatpush1.msra.mxu0 %v685
        %966 = vmatprep.subr.mxu0 %v694
        %967 = vmatpush1.msra.mxu0 %v693
        %968 = vmatprep.subr.mxu0 %v702
        %969 = vmatpush1.msra.mxu0 %v701
        %970 = vmatprep.subr.mxu0 %v710
        %971 = vmatpush1.msra.mxu0 %v709
        %972 = vmatprep.subr.mxu0 %v718
        %973 = vmatpush1.msra.mxu0 %v717
        %974 = vmatprep.subr.mxu0 %v726
        %975 = vmatpush1.msra.mxu0 %v725
        %976 = vmatprep.subr.mxu0 %v734
        %977 = vmatpush1.msra.mxu0 %v733
        %978 = vmatprep.subr.mxu0 %v742
        %979 = vmatpush1.msra.mxu0 %v741
        %980 = vmatprep.subr.mxu0 %v750
        %981 = vmatpush1.msra.mxu0 %v749
        %982 = vmatprep.subr.mxu0 0.0
        %983 = vmatpush1.msra.mxu0 0.0
        %984 = vmatprep.subr.mxu0 0.0
        %985 = vmatpush1.msra.mxu0 0.0
        %986 = vmatprep.subr.mxu0 0.0
        %987 = vmatpush1.msra.mxu0 0.0
        %988 = vmatprep.subr.mxu0 0.0
        %989 = vmatpush1.msra.mxu0 0.0
        %990 = vmatprep.subr.mxu0 0.0
        %991 = vmatpush1.msra.mxu0 0.0
        %992 = vmatprep.subr.mxu0 0.0
        %993 = vmatpush1.msra.mxu0 0.0
        %994 = vmatprep.subr.mxu0 0.0
        %995 = vmatpush1.msra.mxu0 0.0
        %996 = vmatprep.subr.mxu0 0.0
        %997 = vmatpush1.msra.mxu0 0.0
        %998 = vmatprep.subr.mxu0 0.0
        %999 = vmatpush1.msra.mxu0 0.0
        %1000 = vmatprep.subr.mxu0 0.0
        %1001 = vmatpush1.msra.mxu0 0.0
        %1002 = vmatprep.subr.mxu0 0.0
        %1003 = vmatpush1.msra.mxu0 0.0
        %1004 = vmatprep.subr.mxu0 0.0
        %1005 = vmatpush1.msra.mxu0 0.0
        %1006 = vmatprep.subr.mxu0 0.0
        %1007 = vmatpush1.msra.mxu0 0.0
        %1008 = vmatprep.subr.mxu0 0.0
        %1009 = vmatpush1.msra.mxu0 0.0
        %1010 = vmatprep.subr.mxu0 0.0
        %1011 = vmatpush1.msra.mxu0 0.0
        %1012 = vmatprep.subr.mxu0 0.0
        %1013 = vmatpush1.msra.mxu0 0.0
        %1014 = vmatprep.subr.mxu0 0.0
        %1015 = vmatpush1.msra.mxu0 0.0
        %1016 = vmatprep.subr.mxu0 0.0
        %1017 = vmatpush1.msra.mxu0 0.0
        %1018 = vmatprep.subr.mxu0 0.0
        %1019 = vmatpush1.msra.mxu0 0.0
        %1020 = vmatprep.subr.mxu0 0.0
        %1021 = vmatpush1.msra.mxu0 0.0
        %1022 = vmatprep.subr.mxu0 0.0
        %1023 = vmatpush1.msra.mxu0 0.0
        %1024 = vmatprep.subr.mxu0 0.0
        %1025 = vmatpush1.msra.mxu0 0.0
        %1026 = vmatprep.subr.mxu0 0.0
        %1027 = vmatpush1.msra.mxu0 0.0
        %1028 = vmatprep.mubr.f32.mxu0 0.0
        %1029 = vmatmul.mubr.f32.gmra.mrb[0].mxu0 %v393
        %v1030 = vpop.f32.mrb[0].mxu0
        %v1031 = vadd.f32 0.0, %v1030
        %v1032 = vpop.f32.mrb[0].mxu0
        %v1033 = vadd.f32 0.0, %v1032
        %1034 = vdwg.mxu0
        %v1035 = vmul.f32 %v462, %v818
        %v1036 = vmul.f32 %v464, %v820
        %v1037 = vmul.f32 %v533, %v889
        %v1038 = vmul.f32 %v535, %v891
        %v1039 = vmul.f32 %v604, %v960
        %v1040 = vmul.f32 %v606, %v962
        %v1041 = vmul.f32 %v675, %v1031
        %v1042 = vmul.f32 %v677, %v1033
        %v1043 = vadd.f32 %v1035, %v1036
        %v1044 = vadd.f32 %v1043, %v1037
        %v1045 = vadd.f32 %v1044, %v1038
        %v1046 = vadd.f32 %v1045, %v1039
        %v1047 = vadd.f32 %v1046, %v1040
        %v1048 = vadd.f32 %v1047, %v1041
        %v1049 = vadd.f32 %v1048, %v1042
        %v1050 = vld [vmem:[%s3] sm:$0xff]
        %v1051 = vld [vmem:[%s3 + $0x8] sm:$0xff]
        %v1052 = vld [vmem:[%s3 + $0x10] sm:$0xff]
        %v1053 = vld [vmem:[%s3 + $0x18] sm:$0xff]
        %v1054 = vld [vmem:[%s3 + $0x20] sm:$0xff]
        %v1055 = vld [vmem:[%s3 + $0x28] sm:$0xff]
        %v1056 = vld [vmem:[%s3 + $0x30] sm:$0xff]
        %v1057 = vld [vmem:[%s3 + $0x38] sm:$0xff]
        %v1058 = vld [vmem:[%s3 + $0x40] sm:$0xff]
        %v1059 = vld [vmem:[%s3 + $0x48] sm:$0xff]
        %v1060 = vld [vmem:[%s3 + $0x50] sm:$0xff]
        %v1061 = vld [vmem:[%s3 + $0x58] sm:$0xff]
        %v1062 = vld [vmem:[%s3 + $0x60] sm:$0xff]
        %v1063 = vld [vmem:[%s3 + $0x68] sm:$0xff]
        %v1064 = vld [vmem:[%s3 + $0x70] sm:$0xff]
        %v1065 = vld [vmem:[%s3 + $0x78] sm:$0xff]
        %v1066 = vld [vmem:[#allocation7] sm:$0xff]
        %v1067 = vld [vmem:[#allocation7 + $0x8] sm:$0xff]
        %v1068 = vld [vmem:[#allocation7 + $0x10] sm:$0xff]
        %v1069 = vld [vmem:[#allocation7 + $0x18] sm:$0xff]
        %v1070 = vld [vmem:[#allocation7 + $0x20] sm:$0xff]
        %v1071 = vld [vmem:[#allocation7 + $0x28] sm:$0xff]
        %v1072 = vld [vmem:[#allocation7 + $0x30] sm:$0xff]
        %v1073 = vld [vmem:[#allocation7 + $0x38] sm:$0xff]
        %v1074 = vld [vmem:[#allocation7 + $0x40] sm:$0xff]
        %1075 = vmatprep.subr.mxu0 0.0
        %1076 = vmatpush1.msra.mxu0 %v1066
        %1077 = vmatprep.subr.mxu0 0.0
        %1078 = vmatpush1.msra.mxu0 %v1067
        %1079 = vmatprep.subr.mxu0 0.0
        %1080 = vmatpush1.msra.mxu0 %v1068
        %1081 = vmatprep.subr.mxu0 0.0
        %1082 = vmatpush1.msra.mxu0 %v1069
        %1083 = vmatprep.subr.mxu0 0.0
        %1084 = vmatpush1.msra.mxu0 %v1070
        %1085 = vmatprep.subr.mxu0 0.0
        %1086 = vmatpush1.msra.mxu0 %v1071
        %1087 = vmatprep.subr.mxu0 0.0
        %1088 = vmatpush1.msra.mxu0 %v1072
        %1089 = vmatprep.subr.mxu0 0.0
        %1090 = vmatpush1.msra.mxu0 %v1073
        %1091 = vmatprep.subr.mxu0 0.0
        %1092 = vmatpush1.msra.mxu0 %v1074
        %1093 = vmatprep.subr.mxu0 0.0
        %1094 = vmatpush1.msra.mxu0 0.0
        %1095 = vmatprep.subr.mxu0 0.0
        %1096 = vmatpush1.msra.mxu0 0.0
        %1097 = vmatprep.subr.mxu0 0.0
        %1098 = vmatpush1.msra.mxu0 0.0
        %1099 = vmatprep.subr.mxu0 0.0
        %1100 = vmatpush1.msra.mxu0 0.0
        %1101 = vmatprep.subr.mxu0 0.0
        %1102 = vmatpush1.msra.mxu0 0.0
        %1103 = vmatprep.subr.mxu0 0.0
        %1104 = vmatpush1.msra.mxu0 0.0
        %1105 = vmatprep.subr.mxu0 0.0
        %1106 = vmatpush1.msra.mxu0 0.0
        %1107 = vmatprep.subr.mxu0 0.0
        %1108 = vmatpush1.msra.mxu0 0.0
        %1109 = vmatprep.subr.mxu0 0.0
        %1110 = vmatpush1.msra.mxu0 0.0
        %1111 = vmatprep.subr.mxu0 0.0
        %1112 = vmatpush1.msra.mxu0 0.0
        %1113 = vmatprep.subr.mxu0 0.0
        %1114 = vmatpush1.msra.mxu0 0.0
        %1115 = vmatprep.subr.mxu0 0.0
        %1116 = vmatpush1.msra.mxu0 0.0
        %1117 = vmatprep.subr.mxu0 0.0
        %1118 = vmatpush1.msra.mxu0 0.0
        %1119 = vmatprep.subr.mxu0 0.0
        %1120 = vmatpush1.msra.mxu0 0.0
        %1121 = vmatprep.subr.mxu0 0.0
        %1122 = vmatpush1.msra.mxu0 0.0
        %1123 = vmatprep.subr.mxu0 0.0
        %1124 = vmatpush1.msra.mxu0 0.0
        %1125 = vmatprep.subr.mxu0 0.0
        %1126 = vmatpush1.msra.mxu0 0.0
        %1127 = vmatprep.subr.mxu0 0.0
        %1128 = vmatpush1.msra.mxu0 0.0
        %1129 = vmatprep.subr.mxu0 0.0
        %1130 = vmatpush1.msra.mxu0 0.0
        %1131 = vmatprep.subr.mxu0 0.0
        %1132 = vmatpush1.msra.mxu0 0.0
        %1133 = vmatprep.subr.mxu0 0.0
        %1134 = vmatpush1.msra.mxu0 0.0
        %1135 = vmatprep.subr.mxu0 0.0
        %1136 = vmatpush1.msra.mxu0 0.0
        %1137 = vmatprep.subr.mxu0 0.0
        %1138 = vmatpush1.msra.mxu0 0.0
        %1139 = vmatprep.mubr.f32.mxu0 0.0
        %1140 = vmatmul.mubr.f32.gmra.mrb[0].mxu0 %v393
        %v1141 = vpop.f32.mrb[0].mxu0
        %v1142 = vadd.f32 0.0, %v1141
        %v1143 = vpop.f32.mrb[0].mxu0
        %1144 = vdwg.mxu0
        %1145 = vmatprep.subr.mxu0 0.0
        %1146 = vmatpush1.msra.mxu0 %v1050
        %1147 = vmatprep.subr.mxu0 0.0
        %1148 = vmatpush1.msra.mxu0 %v1051
        %1149 = vmatprep.subr.mxu0 0.0
        %1150 = vmatpush1.msra.mxu0 %v1052
        %1151 = vmatprep.subr.mxu0 0.0
        %1152 = vmatpush1.msra.mxu0 %v1053
        %1153 = vmatprep.subr.mxu0 0.0
        %1154 = vmatpush1.msra.mxu0 %v1054
        %1155 = vmatprep.subr.mxu0 0.0
        %1156 = vmatpush1.msra.mxu0 %v1055
        %1157 = vmatprep.subr.mxu0 0.0
        %1158 = vmatpush1.msra.mxu0 %v1056
        %1159 = vmatprep.subr.mxu0 0.0
        %1160 = vmatpush1.msra.mxu0 %v1057
        %1161 = vmatprep.subr.mxu0 0.0
        %1162 = vmatpush1.msra.mxu0 %v1058
        %1163 = vmatprep.subr.mxu0 0.0
        %1164 = vmatpush1.msra.mxu0 %v1059
        %1165 = vmatprep.subr.mxu0 0.0
        %1166 = vmatpush1.msra.mxu0 %v1060
        %1167 = vmatprep.subr.mxu0 0.0
        %1168 = vmatpush1.msra.mxu0 %v1061
        %1169 = vmatprep.subr.mxu0 0.0
        %1170 = vmatpush1.msra.mxu0 %v1062
        %1171 = vmatprep.subr.mxu0 0.0
        %1172 = vmatpush1.msra.mxu0 %v1063
        %1173 = vmatprep.subr.mxu0 0.0
        %1174 = vmatpush1.msra.mxu0 %v1064
        %1175 = vmatprep.subr.mxu0 0.0
        %1176 = vmatpush1.msra.mxu0 %v1065
        %1177 = vmatprep.subr.mxu0 0.0
        %1178 = vmatpush1.msra.mxu0 0.0
        %1179 = vmatprep.subr.mxu0 0.0
        %1180 = vmatpush1.msra.mxu0 0.0
        %1181 = vmatprep.subr.mxu0 0.0
        %1182 = vmatpush1.msra.mxu0 0.0
        %1183 = vmatprep.subr.mxu0 0.0
        %1184 = vmatpush1.msra.mxu0 0.0
        %1185 = vmatprep.subr.mxu0 0.0
        %1186 = vmatpush1.msra.mxu0 0.0
        %1187 = vmatprep.subr.mxu0 0.0
        %1188 = vmatpush1.msra.mxu0 0.0
        %1189 = vmatprep.subr.mxu0 0.0
        %1190 = vmatpush1.msra.mxu0 0.0
        %1191 = vmatprep.subr.mxu0 0.0
        %1192 = vmatpush1.msra.mxu0 0.0
        %1193 = vmatprep.subr.mxu0 0.0
        %1194 = vmatpush1.msra.mxu0 0.0
        %1195 = vmatprep.subr.mxu0 0.0
        %1196 = vmatpush1.msra.mxu0 0.0
        %1197 = vmatprep.subr.mxu0 0.0
        %1198 = vmatpush1.msra.mxu0 0.0
        %1199 = vmatprep.subr.mxu0 0.0
        %1200 = vmatpush1.msra.mxu0 0.0
        %1201 = vmatprep.subr.mxu0 0.0
        %1202 = vmatpush1.msra.mxu0 0.0
        %1203 = vmatprep.subr.mxu0 0.0
        %1204 = vmatpush1.msra.mxu0 0.0
        %1205 = vmatprep.subr.mxu0 0.0
        %1206 = vmatpush1.msra.mxu0 0.0
        %1207 = vmatprep.subr.mxu0 0.0
        %1208 = vmatpush1.msra.mxu0 0.0
        %1209 = vmatprep.mubr.f32.mxu0 0.0
        %1210 = vmatmul.mubr.f32.gmra.mrb[0].mxu0 %v1049
        %v1211 = vpop.f32.mrb[0].mxu0
        %v1212 = vadd.f32 %v1142, %v1211
        %v1213 = vpop.f32.mrb[0].mxu0
        %1214 = vdwg.mxu0
        %v1215 = vmul.f32 %v1212, %v1212
        %v1216 = vld [vmem:[%s5] sm:$0xff]
        %v1217 = vld [vmem:[%s5 + $0x8] sm:$0xff]
        %v1218 = vld [vmem:[%s5 + $0x10] sm:$0xff]
        %v1219 = vld [vmem:[%s5 + $0x18] sm:$0xff]
        %v1220 = vld [vmem:[%s5 + $0x20] sm:$0xff]
        %v1221 = vld [vmem:[%s5 + $0x28] sm:$0xff]
        %v1222 = vld [vmem:[%s5 + $0x30] sm:$0xff]
        %v1223 = vld [vmem:[%s5 + $0x38] sm:$0xff]
        %v1224 = vld [vmem:[%s5 + $0x40] sm:$0xff]
        %v1225 = vld [vmem:[%s5 + $0x48] sm:$0xff]
        %v1226 = vld [vmem:[%s5 + $0x50] sm:$0xff]
        %v1227 = vld [vmem:[%s5 + $0x58] sm:$0xff]
        %v1228 = vld [vmem:[%s5 + $0x60] sm:$0xff]
        %v1229 = vld [vmem:[%s5 + $0x68] sm:$0xff]
        %v1230 = vld [vmem:[%s5 + $0x70] sm:$0xff]
        %v1231 = vld [vmem:[%s5 + $0x78] sm:$0xff]
        %1232 = vmatprep.subr.mxu0 0.0
        %1233 = vmatpush1.msra.mxu0 %v1216
        %1234 = vmatprep.subr.mxu0 0.0
        %1235 = vmatpush1.msra.mxu0 %v1217
        %1236 = vmatprep.subr.mxu0 0.0
        %1237 = vmatpush1.msra.mxu0 %v1218
        %1238 = vmatprep.subr.mxu0 0.0
        %1239 = vmatpush1.msra.mxu0 %v1219
        %1240 = vmatprep.subr.mxu0 0.0
        %1241 = vmatpush1.msra.mxu0 %v1220
        %1242 = vmatprep.subr.mxu0 0.0
        %1243 = vmatpush1.msra.mxu0 %v1221
        %1244 = vmatprep.subr.mxu0 0.0
        %1245 = vmatpush1.msra.mxu0 %v1222
        %1246 = vmatprep.subr.mxu0 0.0
        %1247 = vmatpush1.msra.mxu0 %v1223
        %1248 = vmatprep.subr.mxu0 0.0
        %1249 = vmatpush1.msra.mxu0 %v1224
        %1250 = vmatprep.subr.mxu0 0.0
        %1251 = vmatpush1.msra.mxu0 %v1225
        %1252 = vmatprep.subr.mxu0 0.0
        %1253 = vmatpush1.msra.mxu0 %v1226
        %1254 = vmatprep.subr.mxu0 0.0
        %1255 = vmatpush1.msra.mxu0 %v1227
        %1256 = vmatprep.subr.mxu0 0.0
        %1257 = vmatpush1.msra.mxu0 %v1228
        %1258 = vmatprep.subr.mxu0 0.0
        %1259 = vmatpush1.msra.mxu0 %v1229
        %1260 = vmatprep.subr.mxu0 0.0
        %1261 = vmatpush1.msra.mxu0 %v1230
        %1262 = vmatprep.subr.mxu0 0.0
        %1263 = vmatpush1.msra.mxu0 %v1231
        %1264 = vmatprep.subr.mxu0 0.0
        %1265 = vmatpush1.msra.mxu0 0.0
        %1266 = vmatprep.subr.mxu0 0.0
        %1267 = vmatpush1.msra.mxu0 0.0
        %1268 = vmatprep.subr.mxu0 0.0
        %1269 = vmatpush1.msra.mxu0 0.0
        %1270 = vmatprep.subr.mxu0 0.0
        %1271 = vmatpush1.msra.mxu0 0.0
        %1272 = vmatprep.subr.mxu0 0.0
        %1273 = vmatpush1.msra.mxu0 0.0
        %1274 = vmatprep.subr.mxu0 0.0
        %1275 = vmatpush1.msra.mxu0 0.0
        %1276 = vmatprep.subr.mxu0 0.0
        %1277 = vmatpush1.msra.mxu0 0.0
        %1278 = vmatprep.subr.mxu0 0.0
        %1279 = vmatpush1.msra.mxu0 0.0
        %1280 = vmatprep.subr.mxu0 0.0
        %1281 = vmatpush1.msra.mxu0 0.0
        %1282 = vmatprep.subr.mxu0 0.0
        %1283 = vmatpush1.msra.mxu0 0.0
        %1284 = vmatprep.subr.mxu0 0.0
        %1285 = vmatpush1.msra.mxu0 0.0
        %1286 = vmatprep.subr.mxu0 0.0
        %1287 = vmatpush1.msra.mxu0 0.0
        %1288 = vmatprep.subr.mxu0 0.0
        %1289 = vmatpush1.msra.mxu0 0.0
        %1290 = vmatprep.subr.mxu0 0.0
        %1291 = vmatpush1.msra.mxu0 0.0
        %1292 = vmatprep.subr.mxu0 0.0
        %1293 = vmatpush1.msra.mxu0 0.0
        %1294 = vmatprep.subr.mxu0 0.0
        %1295 = vmatpush1.msra.mxu0 0.0
        %1296 = vmatprep.mubr.f32.mxu0 0.0
        %1297 = vmatmul.mubr.f32.gmra.mrb[0].mxu0 %v1215
        %v1298 = vpop.f32.mrb[0].mxu0
        %v1299 = vadd.f32 0.0, %v1298
        %v1300 = vpop.f32.mrb[0].mxu0
        %1301 = vdwg.mxu0
        %v1302 = vmul.f32 %v1299, %v1299
        %v1303 = vadd.f32 %v1302, 1e-16
        %v1304 = vrsqrt.pop %v1303
        %v1305 = vmul.f32 %v1303, %v1304
        %vm1306 = vcmp.eq.f32.partialorder %v1303, inf
        %v1307 = vsel %vm1306, %v1303, %v1305
        %vm1308 = vcmp.eq.f32.partialorder %v1303, 0.0
        %v1309 = vand.u32 %v1303, 2147483648
        %v1310 = vsel %vm1308, %v1309, %v1307
        %v1311 = vrsqrt.pop %v1310
        %v1312 = vmul.f32 %v1310, %v1311
        %vm1313 = vcmp.eq.f32.partialorder %v1310, inf
        %v1314 = vsel %vm1313, %v1310, %v1312
        %vm1315 = vcmp.eq.f32.partialorder %v1310, 0.0
        %v1316 = vand.u32 %v1310, 2147483648
        %v1317 = vsel %vm1315, %v1316, %v1314
        %vm1318 = vcmask 64512
        %v1319 = vsel %vm1318, %v1317, 0.0
        %1320 = vadd.xlane.f32.xlu0 %v1319
        %v1321 = vpop.xlane.xlu0 %1320
        %v1322 = vrcp.pop 8.0
        %v1323 = vmul.f32 %v1321, %v1322
        %v1324 = vadd.f32 %v1323, 1e-06
        %v1325 = vrcp.pop %v1324
        %v1326 = vld [vmem:[%s6] sm:$0x1]
        %v1328 = vlaneseq
        %v1329 = vshrl.u32 %v1328, 7
        %v1330 = vsub.s32 0, %v1329
        %v1331 = vrot.slane %v1326, %v1330
        %v1333 = vmul.f32 %v1212, %v1331
        %v1334 = vmul.f32 %v1333, %v1325
        %1335 = vst [vmem:[%s313] sm:$0xff] %v1334
        %s1336 = sand.u32 %s183, 1
        %s1337 = scalar_lea.sflag [#allocation4], %s1336
        %s1338 = sand.u32 %s183, 1
        %s1339 = smul.addr %s1338, 8
        %s1340 = scalar_lea.vmem [#allocation8], %s1339
        // Predicated region
        $region61: #{tpu_custom_call.1} parent=47 // pred_check
          %p1341 = pneg %p193
        $region62: #{tpu_custom_call.1} parent=47 // pred_check_branch
          %1343 = sbr.rel (%p1341) target = $region64
        $region63: #{tpu_custom_call.1} parent=47 // pred_region
          %s1345 = ssub.s32 128, 128
          %1346 = vsyncadd %s1337, %s1345
          %s1347 = smul.addr %s23, 128
          %s1348 = scalar_lea.hbm %s7, %s1347
          %s1350 = sshll.u32 %s1340, 4
          %s1351 = int_to_ptr.vmem [resolvable:$true] %s1350
          %1353 = dma.vmem_to_hbm [thread:$0]  %s1351, 128, %s1348, %s1337
        $region64: #{tpu_custom_call.1} parent=47 // pred_fallthru
          _
      $region48: #{tpu_custom_call.1} parent=5 // pred_fallthru
        _
      %p1354 = scmp.le.s32.totalorder 2, %s18
      // Predicated region
      $region65: #{tpu_custom_call.1} parent=5 // pred_check
        %p1355 = pneg %p1354
      $region66: #{tpu_custom_call.1} parent=5 // pred_check_branch
        %1357 = sbr.rel (%p1355) target = $region68
      $region67: #{tpu_custom_call.1} parent=5 // pred_region
        %s1358 = ssub.s32 %s18, 2
        // Predicated region
        $region69: #{tpu_custom_call.1} parent=67 // pred_check
          %p1359 = pneg %p199
        $region70: #{tpu_custom_call.1} parent=67 // pred_check_branch
          %1361 = sbr.rel (%p1359) target = $region72
        $region71: #{tpu_custom_call.1} parent=67 // pred_region
          %s1362 = sand.u32 %s184, 1
          %s1363 = scalar_lea.sflag [#allocation4], %s1362
          %s1364 = sand.u32 %s184, 1
          %s1365 = smul.addr %s1364, 8
          %s1366 = scalar_lea.vmem [#allocation8], %s1365
          %1367 = dma.done %s1363, 128
        $region72: #{tpu_custom_call.1} parent=67 // pred_fallthru
          _
      $region68: #{tpu_custom_call.1} parent=5 // pred_fallthru
        _
    $region6: #{tpu_custom_call.1} parent=1 // loop_footer
      %s22 = sadd.s32 1, %s18
    $region7: #{tpu_custom_call.1} parent=1 // loop_footer_branch
      %17 = sbr.rel target = $region3
    $region8: #{tpu_custom_call.1} parent=1 // loop_exit
      _
    %1368 = vsyncpa [#allocation3], 1
    %s1369 = scalar_lea.sflag [#allocation3], 1
    %1370 = vsyncpa %s1369, 1
    %1371 = vsyncpa [#allocation6], 1
    %1372 = vsyncpa [#allocation4], 1
    %s1373 = scalar_lea.sflag [#allocation4], 1
    %1374 = vsyncpa %s1373, 1

</llo_original>
